<compile_context>
chip_gen: v6e
topology: v6e:2x2x1
jax: 0.10.0
libtpu: 0.0.40
codegen_flags: <defaults>
</compile_context>

<pallas_src>
import functools

import jax
import jax.numpy as jnp
from jax.experimental import pallas as pl
from jax.experimental.pallas import tpu as pltpu

LANE = 128                       # TPU lane width; feature slabs padded to this.
NEG_INF = -1e30                  # finite "-inf": exp underflows to exactly 0.
_TM_CANDIDATES = (512, 256, 128, 64, 32, 16, 8)


def _round_up(x, m):
    return ((x + m - 1) // m) * m


def _plan(n):
    """Pick (row-tile TM, padded N, vmem_limit_bytes) from the chip's VMEM capacity."""
    try:
        cap = int(pltpu.get_tpu_info().vmem_capacity_bytes)
    except Exception:
        cap = 64 << 20                        # v7x worst case (64 MiB per TensorCore)
    budget = int(cap * 0.75)                  # ~96 MiB on v5e/v6e, ~48 MiB on v7x
    n8 = _round_up(max(n, 8), 8)
    for tm in _TM_CANDIDATES:
        if tm > n8:
            continue
        n_pad = _round_up(n8, tm)
        need = (2 * n_pad * LANE * 2          # resident h (bf16, buffered)
                + n_pad * 64                  # a_src row / a_dst column
                + 2 * tm * n_pad * 2          # adj tile, double-buffered (bf16)
                + 3 * tm * n_pad * 4          # f32 score / p / logw temporaries
                + 2 * tm * LANE * 4           # out tile, double-buffered
                + (2 << 20))                  # slack
        if need <= budget:
            return tm, n_pad, budget
    return 8, _round_up(n8, 8), budget


def gat_attn_kernel(h_ref, asrc_ref, adst_ref, b_ref, adj_ref, out_ref, *,
                    negative_slope, apply_relu):
    """One weighted-GAT attention layer for a (TM, N) row tile of target nodes.

    h_ref    : (N_pad, 128)  bf16, VMEM-resident (constant block index).
    asrc_ref : (1, N_pad)    f32, a_src laid out along lanes (resident).
    adst_ref : (TM, 1)       f32, a_dst for this row tile.
    b_ref    : (1, 128)      f32 bias (padded).
    adj_ref  : (TM, N_pad)   bf16, the pipelined O(N^2) stream.
    out_ref  : (TM, 128)     lane-dense output tile.
    """
    adj = adj_ref[...].astype(jnp.float32)
    logw = jnp.where(adj > 0.0, jnp.log2(jnp.maximum(adj, 1e-38)),
                     jnp.float32(NEG_INF))                       # mask "no edge"
    s = adst_ref[...] + asrc_ref[...]                            # (TM,1)+(1,N) VPU bcast
    score = jnp.where(s >= 0, s, negative_slope * s) + logw      # leaky_relu + log2(w)

    # Row-wise softmax with deferred normalization (reciprocal on the EUP).
    m = jnp.max(score, axis=-1, keepdims=True)
    p = jnp.exp(score - m)
    denom = jnp.sum(p, axis=-1, keepdims=True)
    agg = jnp.dot(p.astype(jnp.bfloat16), h_ref[...],
                  preferred_element_type=jnp.float32)            # MXU: bf16 in, f32 acc
    out = agg * pl.reciprocal(denom, approx=True) + b_ref[...]
    if apply_relu:
        out = jnp.maximum(out, 0.0)
    out_ref[...] = out.astype(out_ref.dtype)                     # lane-dense store


def _attention_layer(h_bf16, asrc_row, adst_col, bias_row, adj_bf16, *,
                     out_dtype, tm, vmem_limit, negative_slope, apply_relu):
    n_pad = adj_bf16.shape[0]
    kernel = functools.partial(gat_attn_kernel, negative_slope=negative_slope,
                               apply_relu=apply_relu)
    return pl.pallas_call(
        kernel,
        out_shape=jax.ShapeDtypeStruct((n_pad, LANE), out_dtype),
        grid=(n_pad // tm,),
        in_specs=[
            pl.BlockSpec((n_pad, LANE), lambda i: (0, 0)),   # h       (resident)
            pl.BlockSpec((1, n_pad), lambda i: (0, 0)),      # a_src   (row form, resident)
            pl.BlockSpec((tm, 1), lambda i: (i, 0)),         # a_dst   (per row tile)
            pl.BlockSpec((1, LANE), lambda i: (0, 0)),       # bias    (resident)
            pl.BlockSpec((tm, n_pad), lambda i: (i, 0)),     # adj     (pipelined stream)
        ],
        out_specs=pl.BlockSpec((tm, LANE), lambda i: (i, 0)),
        compiler_params=pltpu.CompilerParams(
            dimension_semantics=("parallel",),               # megacore split on v7x
            vmem_limit_bytes=vmem_limit),
    )(h_bf16, asrc_row, adst_col, bias_row, adj_bf16)


def _precompute(feat, w, asrc, adst, bias):
    """h = feat @ W plus attention logit halves, padded/laid out for the kernel."""
    h = jnp.dot(feat, w, preferred_element_type=jnp.float32)     # [n_pad, C]  (tiny, XLA)
    a_src = jnp.dot(h, asrc.T)                                   # [n_pad, 1]
    a_dst = jnp.dot(h, adst.T)                                   # [n_pad, 1]
    h_pad = jnp.pad(h, ((0, 0), (0, LANE - h.shape[1]))).astype(jnp.bfloat16)
    bias_pad = jnp.pad(bias, ((0, 0), (0, LANE - bias.shape[1])))
    return h_pad, a_src.T, a_dst, bias_pad                       # a_src.T: [1, n_pad]


@jax.jit
def gat_forward(x, adj, params):
    n, _ = x.shape
    hidden = params["w1"].shape[1]
    classes = params["w2"].shape[1]
    assert hidden <= LANE and classes <= LANE
    tm, n_pad, vmem_limit = _plan(n)

    pad_n = n_pad - n
    x_pad = jnp.pad(x.astype(jnp.float32), ((0, pad_n), (0, 0)))
    # adj shipped in bf16: halves the only O(N^2) HBM stream (padded rows/cols are 0 ->
    # masked inside the kernel; junk in padded output rows is sliced off below).
    adj_pad = jnp.pad(adj, ((0, pad_n), (0, pad_n))).astype(jnp.bfloat16)

    # ----- layer 1 (WeightedGATConv + ReLU; inter-layer dropout is a no-op in eval) -----
    h1, as1, ad1, b1 = _precompute(x_pad, params["w1"], params["asrc1"],
                                   params["adst1"], params["b1"])
    out1 = _attention_layer(h1, as1, ad1, b1, adj_pad, out_dtype=jnp.bfloat16,
                            tm=tm, vmem_limit=vmem_limit,
                            negative_slope=0.2, apply_relu=True)
    # ----- layer 2 -----
    x2 = out1[:, :hidden].astype(jnp.float32)
    h2, as2, ad2, b2 = _precompute(x2, params["w2"], params["asrc2"],
                                   params["adst2"], params["b2"])
    out2 = _attention_layer(h2, as2, ad2, b2, adj_pad, out_dtype=jnp.float32,
                            tm=tm, vmem_limit=vmem_limit,
                            negative_slope=0.2, apply_relu=False)
    return out2[:n, :classes]


def gat_reference(x, adj, params):
    """Pure-JAX f32 reference of the same forward pass (loose numerical check)."""
    def layer(xx, w, asrc, adst, b):
        h = xx @ w
        a_src = jnp.sum(h * asrc, axis=-1, keepdims=True)
        a_dst = jnp.sum(h * adst, axis=-1, keepdims=True)
        s = a_dst + a_src.T
        e = jnp.where(s >= 0, s, 0.2 * s)
        score = jnp.where(adj > 0.0, e + jnp.log2(jnp.maximum(adj, 1e-38)), -jnp.inf)
        alpha = jax.nn.softmax(score, axis=-1)
        return alpha @ h + b
    h1 = jax.nn.relu(layer(x, params["w1"], params["asrc1"], params["adst1"], params["b1"]))
    return layer(h1, params["w2"], params["asrc2"], params["adst2"], params["b2"])


if __name__ == "__main__":
    N, F_IN, HIDDEN, CLASSES = 128, 32, 16, 8

    key = jax.random.PRNGKey(0)
    ks = jax.random.split(key, 9)

    def glorot(k, shape):
        fan_in, fan_out = shape[0], shape[-1]
        lim = (6.0 / (fan_in + fan_out)) ** 0.5
        return jax.random.uniform(k, shape, jnp.float32, -lim, lim)

    params = {
        "w1": glorot(ks[0], (F_IN, HIDDEN)),     # conv1 lin weight
        "asrc1": glorot(ks[1], (1, HIDDEN)),     # att_src  [1, heads*C]
        "adst1": glorot(ks[2], (1, HIDDEN)),     # att_dst
        "b1": jnp.zeros((1, HIDDEN), jnp.float32),
        "w2": glorot(ks[3], (HIDDEN, CLASSES)),
        "asrc2": glorot(ks[4], (1, CLASSES)),
        "adst2": glorot(ks[5], (1, CLASSES)),
        "b2": jnp.zeros((1, CLASSES), jnp.float32),
    }

    x = jax.random.normal(ks[6], (N, F_IN), jnp.float32)

    # Random weighted adjacency (~30% density, weights in (0.05, 1]),
    # diagonal forced to 1.0 (add_self_loops=True, fill_value=1.0).
    wvals = jax.random.uniform(ks[7], (N, N), jnp.float32, 0.05, 1.0)
    mask = jax.random.uniform(ks[8], (N, N)) < 0.3
    adj = jnp.where(mask, wvals, 0.0)
    eye = jnp.eye(N, dtype=jnp.float32)
    adj = adj * (1.0 - eye) + eye

    out = gat_forward(x, adj, params)
    out = jax.block_until_ready(out)

    assert out.shape == (N, CLASSES), out.shape
    assert bool(jnp.all(jnp.isfinite(out)))

    ref = gat_reference(x, adj, params)
    assert bool(jnp.allclose(out, ref, rtol=5e-2, atol=5e-2)), (
        float(jnp.max(jnp.abs(out - ref))))
    print("KERNEL_OK")
</pallas_src>

<mosaic_0001>
module attributes {stable_mosaic.version = 11 : i64} {
  func.func @gat_attn_kernel(%arg0: i32, %arg1: memref<128x128xbf16, #tpu.memory_space<vmem>>, %arg2: memref<1x128xf32, #tpu.memory_space<vmem>>, %arg3: memref<128x1xf32, #tpu.memory_space<vmem>>, %arg4: memref<1x128xf32, #tpu.memory_space<vmem>>, %arg5: memref<128x128xbf16, #tpu.memory_space<vmem>>, %arg6: memref<128x128xbf16, #tpu.memory_space<vmem>>) attributes {dimension_semantics = [#tpu.dimension_semantics<parallel>], iteration_bounds = array<i64: 1>, scalar_prefetch = 0 : i64, scratch_operands = 0 : i64, tpu.core_type = #tpu.core_type<tc>, window_params = [{pipeline_mode = #tpu.pipeline_mode<synchronous>, transform_indices = @transform_0, window_bounds = array<i64: 128, 128>}, {pipeline_mode = #tpu.pipeline_mode<synchronous>, transform_indices = @transform_1, window_bounds = array<i64: 1, 128>}, {transform_indices = @transform_2, window_bounds = array<i64: 128, 1>}, {pipeline_mode = #tpu.pipeline_mode<synchronous>, transform_indices = @transform_3, window_bounds = array<i64: 1, 128>}, {transform_indices = @transform_4, window_bounds = array<i64: 128, 128>}, {transform_indices = @transform_5, window_bounds = array<i64: 128, 128>}]} {
    %c0 = arith.constant 0 : index
    %c0_0 = arith.constant 0 : index
    %0 = vector.load %arg5[%c0, %c0_0] : memref<128x128xbf16, #tpu.memory_space<vmem>>, vector<128x128xbf16>
    %1 = arith.extf %0 : vector<128x128xbf16> to vector<128x128xf32>
    %cst = arith.constant 0.000000e+00 : f32
    %2 = vector.broadcast %cst : f32 to vector<128x128xf32>
    %3 = arith.cmpf ogt, %1, %2 : vector<128x128xf32>
    %cst_1 = arith.constant 9.99999935E-39 : f32
    %4 = vector.broadcast %cst_1 : f32 to vector<128x128xf32>
    %5 = arith.maximumf %1, %4 : vector<128x128xf32>
    %6 = math.log %5 : vector<128x128xf32>
    %cst_2 = arith.constant 2.000000e+00 : f32
    %7 = math.log %cst_2 : f32
    %8 = vector.broadcast %7 : f32 to vector<128x128xf32>
    %9 = arith.divf %6, %8 : vector<128x128xf32>
    %cst_3 = arith.constant -1.000000e+30 : f32
    %10 = vector.broadcast %cst_3 : f32 to vector<128x128xf32>
    %11 = arith.select %3, %9, %10 : vector<128x128xi1>, vector<128x128xf32>
    %c0_4 = arith.constant 0 : index
    %c0_5 = arith.constant 0 : index
    %12 = vector.load %arg3[%c0_4, %c0_5] : memref<128x1xf32, #tpu.memory_space<vmem>>, vector<128x1xf32>
    %c0_6 = arith.constant 0 : index
    %c0_7 = arith.constant 0 : index
    %13 = vector.load %arg2[%c0_6, %c0_7] : memref<1x128xf32, #tpu.memory_space<vmem>>, vector<1x128xf32>
    %14 = vector.broadcast %12 : vector<128x1xf32> to vector<128x128xf32>
    %15 = vector.broadcast %13 : vector<1x128xf32> to vector<128x128xf32>
    %16 = arith.addf %14, %15 : vector<128x128xf32>
    %cst_8 = arith.constant 0.000000e+00 : f32
    %17 = vector.broadcast %cst_8 : f32 to vector<128x128xf32>
    %18 = arith.cmpf oge, %16, %17 : vector<128x128xf32>
    %cst_9 = arith.constant 2.000000e-01 : f32
    %19 = vector.broadcast %cst_9 : f32 to vector<128x128xf32>
    %20 = arith.mulf %19, %16 : vector<128x128xf32>
    %21 = arith.select %18, %16, %20 : vector<128x128xi1>, vector<128x128xf32>
    %22 = arith.addf %21, %11 : vector<128x128xf32>
    %cst_10 = arith.constant dense<0xFF800000> : vector<128xf32>
    %23 = vector.multi_reduction <maximumf>, %22, %cst_10 [1] : vector<128x128xf32> to vector<128xf32>
    %24 = vector.shape_cast %23 : vector<128xf32> to vector<128x1xf32>
    %25 = vector.broadcast %24 : vector<128x1xf32> to vector<128x128xf32>
    %26 = arith.subf %22, %25 : vector<128x128xf32>
    %27 = math.exp %26 : vector<128x128xf32>
    %cst_11 = arith.constant dense<0.000000e+00> : vector<128xf32>
    %28 = vector.multi_reduction <add>, %27, %cst_11 [1] : vector<128x128xf32> to vector<128xf32>
    %29 = vector.shape_cast %28 : vector<128xf32> to vector<128x1xf32>
    %30 = arith.truncf %27 : vector<128x128xf32> to vector<128x128xbf16>
    %c0_12 = arith.constant 0 : index
    %c0_13 = arith.constant 0 : index
    %31 = vector.load %arg1[%c0_12, %c0_13] : memref<128x128xbf16, #tpu.memory_space<vmem>>, vector<128x128xbf16>
    %cst_14 = arith.constant dense<0.000000e+00> : vector<128x128xf32>
    %32 = tpu.matmul %30, %31, %cst_14 {dimension_numbers = #tpu.dot_dimension_numbers<[1], [0], [0], [1], [0, 0, 1, 1], [], []>} : vector<128x128xbf16>, vector<128x128xbf16>, vector<128x128xf32> -> vector<128x128xf32>
    %33 = tpu.reciprocal %29 {approx = true} : vector<128x1xf32> -> vector<128x1xf32>
    %34 = vector.broadcast %33 : vector<128x1xf32> to vector<128x128xf32>
    %35 = arith.mulf %32, %34 : vector<128x128xf32>
    %c0_15 = arith.constant 0 : index
    %c0_16 = arith.constant 0 : index
    %36 = vector.load %arg4[%c0_15, %c0_16] : memref<1x128xf32, #tpu.memory_space<vmem>>, vector<1x128xf32>
    %37 = vector.broadcast %36 : vector<1x128xf32> to vector<128x128xf32>
    %38 = arith.addf %35, %37 : vector<128x128xf32>
    %cst_17 = arith.constant 0.000000e+00 : f32
    %39 = vector.broadcast %cst_17 : f32 to vector<128x128xf32>
    %40 = arith.maximumf %38, %39 : vector<128x128xf32>
    %41 = arith.truncf %40 : vector<128x128xf32> to vector<128x128xbf16>
    %c0_18 = arith.constant 0 : index
    %c0_19 = arith.constant 0 : index
    %42 = vector.load %arg6[%c0_18, %c0_19] : memref<128x128xbf16, #tpu.memory_space<vmem>>, vector<128x128xbf16>
    tpu.vector_store %arg6[%c0_18, %c0_19], %41 {strides = array<i32>} : memref<128x128xbf16, #tpu.memory_space<vmem>>, vector<128x128xbf16>,
    return
  }
  func.func @transform_0(%arg0: i32) -> (i32, i32) {
    %c0_i32 = arith.constant 0 : i32
    %c0_i32_0 = arith.constant 0 : i32
    %c0_i32_1 = arith.constant 0 : i32
    return %c0_i32, %c0_i32_0 : i32, i32
  }
  func.func @transform_1(%arg0: i32) -> (i32, i32) {
    %c0_i32 = arith.constant 0 : i32
    %c0_i32_0 = arith.constant 0 : i32
    %c0_i32_1 = arith.constant 0 : i32
    return %c0_i32, %c0_i32_0 : i32, i32
  }
  func.func @transform_2(%arg0: i32) -> (i32, i32) {
    %c0_i32 = arith.constant 0 : i32
    %c0_i32_0 = arith.constant 0 : i32
    return %arg0, %c0_i32 : i32, i32
  }
  func.func @transform_3(%arg0: i32) -> (i32, i32) {
    %c0_i32 = arith.constant 0 : i32
    %c0_i32_0 = arith.constant 0 : i32
    %c0_i32_1 = arith.constant 0 : i32
    return %c0_i32, %c0_i32_0 : i32, i32
  }
  func.func @transform_4(%arg0: i32) -> (i32, i32) {
    %c0_i32 = arith.constant 0 : i32
    %c0_i32_0 = arith.constant 0 : i32
    return %arg0, %c0_i32 : i32, i32
  }
  func.func @transform_5(%arg0: i32) -> (i32, i32) {
    %c0_i32 = arith.constant 0 : i32
    %c0_i32_0 = arith.constant 0 : i32
    return %arg0, %c0_i32 : i32, i32
  }
}

module attributes {stable_mosaic.version = 11 : i64} {
  func.func @gat_attn_kernel(%arg0: i32, %arg1: memref<128x128xbf16, #tpu.memory_space<vmem>>, %arg2: memref<1x128xf32, #tpu.memory_space<vmem>>, %arg3: memref<128x1xf32, #tpu.memory_space<vmem>>, %arg4: memref<1x128xf32, #tpu.memory_space<vmem>>, %arg5: memref<128x128xbf16, #tpu.memory_space<vmem>>, %arg6: memref<128x128xf32, #tpu.memory_space<vmem>>) attributes {dimension_semantics = [#tpu.dimension_semantics<parallel>], iteration_bounds = array<i64: 1>, scalar_prefetch = 0 : i64, scratch_operands = 0 : i64, tpu.core_type = #tpu.core_type<tc>, window_params = [{pipeline_mode = #tpu.pipeline_mode<synchronous>, transform_indices = @transform_0, window_bounds = array<i64: 128, 128>}, {pipeline_mode = #tpu.pipeline_mode<synchronous>, transform_indices = @transform_1, window_bounds = array<i64: 1, 128>}, {transform_indices = @transform_2, window_bounds = array<i64: 128, 1>}, {pipeline_mode = #tpu.pipeline_mode<synchronous>, transform_indices = @transform_3, window_bounds = array<i64: 1, 128>}, {transform_indices = @transform_4, window_bounds = array<i64: 128, 128>}, {transform_indices = @transform_5, window_bounds = array<i64: 128, 128>}]} {
    %c0 = arith.constant 0 : index
    %c0_0 = arith.constant 0 : index
    %0 = vector.load %arg5[%c0, %c0_0] : memref<128x128xbf16, #tpu.memory_space<vmem>>, vector<128x128xbf16>
    %1 = arith.extf %0 : vector<128x128xbf16> to vector<128x128xf32>
    %cst = arith.constant 0.000000e+00 : f32
    %2 = vector.broadcast %cst : f32 to vector<128x128xf32>
    %3 = arith.cmpf ogt, %1, %2 : vector<128x128xf32>
    %cst_1 = arith.constant 9.99999935E-39 : f32
    %4 = vector.broadcast %cst_1 : f32 to vector<128x128xf32>
    %5 = arith.maximumf %1, %4 : vector<128x128xf32>
    %6 = math.log %5 : vector<128x128xf32>
    %cst_2 = arith.constant 2.000000e+00 : f32
    %7 = math.log %cst_2 : f32
    %8 = vector.broadcast %7 : f32 to vector<128x128xf32>
    %9 = arith.divf %6, %8 : vector<128x128xf32>
    %cst_3 = arith.constant -1.000000e+30 : f32
    %10 = vector.broadcast %cst_3 : f32 to vector<128x128xf32>
    %11 = arith.select %3, %9, %10 : vector<128x128xi1>, vector<128x128xf32>
    %c0_4 = arith.constant 0 : index
    %c0_5 = arith.constant 0 : index
    %12 = vector.load %arg3[%c0_4, %c0_5] : memref<128x1xf32, #tpu.memory_space<vmem>>, vector<128x1xf32>
    %c0_6 = arith.constant 0 : index
    %c0_7 = arith.constant 0 : index
    %13 = vector.load %arg2[%c0_6, %c0_7] : memref<1x128xf32, #tpu.memory_space<vmem>>, vector<1x128xf32>
    %14 = vector.broadcast %12 : vector<128x1xf32> to vector<128x128xf32>
    %15 = vector.broadcast %13 : vector<1x128xf32> to vector<128x128xf32>
    %16 = arith.addf %14, %15 : vector<128x128xf32>
    %cst_8 = arith.constant 0.000000e+00 : f32
    %17 = vector.broadcast %cst_8 : f32 to vector<128x128xf32>
    %18 = arith.cmpf oge, %16, %17 : vector<128x128xf32>
    %cst_9 = arith.constant 2.000000e-01 : f32
    %19 = vector.broadcast %cst_9 : f32 to vector<128x128xf32>
    %20 = arith.mulf %19, %16 : vector<128x128xf32>
    %21 = arith.select %18, %16, %20 : vector<128x128xi1>, vector<128x128xf32>
    %22 = arith.addf %21, %11 : vector<128x128xf32>
    %cst_10 = arith.constant dense<0xFF800000> : vector<128xf32>
    %23 = vector.multi_reduction <maximumf>, %22, %cst_10 [1] : vector<128x128xf32> to vector<128xf32>
    %24 = vector.shape_cast %23 : vector<128xf32> to vector<128x1xf32>
    %25 = vector.broadcast %24 : vector<128x1xf32> to vector<128x128xf32>
    %26 = arith.subf %22, %25 : vector<128x128xf32>
    %27 = math.exp %26 : vector<128x128xf32>
    %cst_11 = arith.constant dense<0.000000e+00> : vector<128xf32>
    %28 = vector.multi_reduction <add>, %27, %cst_11 [1] : vector<128x128xf32> to vector<128xf32>
    %29 = vector.shape_cast %28 : vector<128xf32> to vector<128x1xf32>
    %30 = arith.truncf %27 : vector<128x128xf32> to vector<128x128xbf16>
    %c0_12 = arith.constant 0 : index
    %c0_13 = arith.constant 0 : index
    %31 = vector.load %arg1[%c0_12, %c0_13] : memref<128x128xbf16, #tpu.memory_space<vmem>>, vector<128x128xbf16>
    %cst_14 = arith.constant dense<0.000000e+00> : vector<128x128xf32>
    %32 = tpu.matmul %30, %31, %cst_14 {dimension_numbers = #tpu.dot_dimension_numbers<[1], [0], [0], [1], [0, 0, 1, 1], [], []>} : vector<128x128xbf16>, vector<128x128xbf16>, vector<128x128xf32> -> vector<128x128xf32>
    %33 = tpu.reciprocal %29 {approx = true} : vector<128x1xf32> -> vector<128x1xf32>
    %34 = vector.broadcast %33 : vector<128x1xf32> to vector<128x128xf32>
    %35 = arith.mulf %32, %34 : vector<128x128xf32>
    %c0_15 = arith.constant 0 : index
    %c0_16 = arith.constant 0 : index
    %36 = vector.load %arg4[%c0_15, %c0_16] : memref<1x128xf32, #tpu.memory_space<vmem>>, vector<1x128xf32>
    %37 = vector.broadcast %36 : vector<1x128xf32> to vector<128x128xf32>
    %38 = arith.addf %35, %37 : vector<128x128xf32>
    %c0_17 = arith.constant 0 : index
    %c0_18 = arith.constant 0 : index
    %39 = vector.load %arg6[%c0_17, %c0_18] : memref<128x128xf32, #tpu.memory_space<vmem>>, vector<128x128xf32>
    tpu.vector_store %arg6[%c0_17, %c0_18], %38 {strides = array<i32>} : memref<128x128xf32, #tpu.memory_space<vmem>>, vector<128x128xf32>,
    return
  }
  func.func @transform_0(%arg0: i32) -> (i32, i32) {
    %c0_i32 = arith.constant 0 : i32
    %c0_i32_0 = arith.constant 0 : i32
    %c0_i32_1 = arith.constant 0 : i32
    return %c0_i32, %c0_i32_0 : i32, i32
  }
  func.func @transform_1(%arg0: i32) -> (i32, i32) {
    %c0_i32 = arith.constant 0 : i32
    %c0_i32_0 = arith.constant 0 : i32
    %c0_i32_1 = arith.constant 0 : i32
    return %c0_i32, %c0_i32_0 : i32, i32
  }
  func.func @transform_2(%arg0: i32) -> (i32, i32) {
    %c0_i32 = arith.constant 0 : i32
    %c0_i32_0 = arith.constant 0 : i32
    return %arg0, %c0_i32 : i32, i32
  }
  func.func @transform_3(%arg0: i32) -> (i32, i32) {
    %c0_i32 = arith.constant 0 : i32
    %c0_i32_0 = arith.constant 0 : i32
    %c0_i32_1 = arith.constant 0 : i32
    return %c0_i32, %c0_i32_0 : i32, i32
  }
  func.func @transform_4(%arg0: i32) -> (i32, i32) {
    %c0_i32 = arith.constant 0 : i32
    %c0_i32_0 = arith.constant 0 : i32
    return %arg0, %c0_i32 : i32, i32
  }
  func.func @transform_5(%arg0: i32) -> (i32, i32) {
    %c0_i32 = arith.constant 0 : i32
    %c0_i32_0 = arith.constant 0 : i32
    return %arg0, %c0_i32 : i32, i32
  }
}

</mosaic_0001>

<llo_original>
// kernel: gat_forward.3
$region0: #{gat_forward.3}
  #allocation0 [shape = 'u32[]', space=smem, size = 0x4, offset = 0x4, fixed_abs, tag = 'smem constant byte address 0x4 - core index']
  #allocation1 [shape = 'u32[144,128]{1,0:T(1,128)}', space=vmem, size = 0x12000, scoped, tag = 'internal scratch']
  %s0 = inlined_call_operand.vmem [shape: bf16[128,128], index: 0, kind: input, shape index: {}]
  %s1 = inlined_call_operand.vmem [shape: f32[1,128], index: 1, kind: input, shape index: {}]
  %s2 = inlined_call_operand.vmem [shape: f32[128,1], index: 2, kind: input, shape index: {}]
  %s3 = inlined_call_operand.vmem [shape: f32[1,128], index: 3, kind: input, shape index: {}]
  %s4 = inlined_call_operand.vmem [shape: bf16[128,128], index: 4, kind: input, shape index: {}]
  %s5 = inlined_call_operand.vmem [shape: f32[128,128], index: 5, kind: output, shape index: {}]
  %s6 = sld [smem:[#allocation0]]
  $region30: #{gat_forward.3} parent=0
    _
  %s8 = ssub.s32 1, %s6
  %s9 = scalar_select 0, %s8, %s6
  // Predicated region
  $region2: #{gat_forward.3} parent=0 // pred_check
    _
  $region3: #{gat_forward.3} parent=0 // pred_check_branch
    %11 = sbr.rel (0) target = $region5
  $region4: #{gat_forward.3} parent=0 // pred_region
    _
  $region5: #{gat_forward.3} parent=0 // pred_fallthru
    _
  // Predicated region
  $region6: #{gat_forward.3} parent=0 // pred_check
    _
  $region7: #{gat_forward.3} parent=0 // pred_check_branch
    %13 = sbr.rel (0) target = $region9
  $region8: #{gat_forward.3} parent=0 // pred_region
    _
  $region9: #{gat_forward.3} parent=0 // pred_fallthru
    _
  // Predicated region
  $region10: #{gat_forward.3} parent=0 // pred_check
    _
  $region11: #{gat_forward.3} parent=0 // pred_check_branch
    %15 = sbr.rel (0) target = $region13
  $region12: #{gat_forward.3} parent=0 // pred_region
    _
  $region13: #{gat_forward.3} parent=0 // pred_fallthru
    _
  // Predicated region
  $region14: #{gat_forward.3} parent=0 // pred_check
    _
  $region15: #{gat_forward.3} parent=0 // pred_check_branch
    %17 = sbr.rel (0) target = $region17
  $region16: #{gat_forward.3} parent=0 // pred_region
    _
  $region17: #{gat_forward.3} parent=0 // pred_fallthru
    _
  // Predicated region
  $region18: #{gat_forward.3} parent=0 // pred_check
    _
  $region19: #{gat_forward.3} parent=0 // pred_check_branch
    %19 = sbr.rel (0) target = $region21
  $region20: #{gat_forward.3} parent=0 // pred_region
    _
  $region21: #{gat_forward.3} parent=0 // pred_fallthru
    _
  %v21 = vld [vmem:[%s4] sm:$0xf]
  %v22 = vld [vmem:[%s4 + $0x4] sm:$0xf]
  %v23 = vld [vmem:[%s4 + $0x8] sm:$0xf]
  %v24 = vld [vmem:[%s4 + $0xc] sm:$0xf]
  %v25 = vld [vmem:[%s4 + $0x10] sm:$0xf]
  %v26 = vld [vmem:[%s4 + $0x14] sm:$0xf]
  %v27 = vld [vmem:[%s4 + $0x18] sm:$0xf]
  %v28 = vld [vmem:[%s4 + $0x1c] sm:$0xf]
  %v29 = vld [vmem:[%s4 + $0x20] sm:$0xf]
  %v30 = vld [vmem:[%s4 + $0x24] sm:$0xf]
  %v31 = vld [vmem:[%s4 + $0x28] sm:$0xf]
  %v32 = vld [vmem:[%s4 + $0x2c] sm:$0xf]
  %v33 = vld [vmem:[%s4 + $0x30] sm:$0xf]
  %v34 = vld [vmem:[%s4 + $0x34] sm:$0xf]
  %v35 = vld [vmem:[%s4 + $0x38] sm:$0xf]
  %v36 = vld [vmem:[%s4 + $0x3c] sm:$0xf]
  %v37 = vunpack.c.l.bf16 %v21
  %v38 = vunpack.c.l.bf16 %v22
  %v39 = vunpack.c.l.bf16 %v23
  %v40 = vunpack.c.l.bf16 %v24
  %v41 = vunpack.c.l.bf16 %v25
  %v42 = vunpack.c.l.bf16 %v26
  %v43 = vunpack.c.l.bf16 %v27
  %v44 = vunpack.c.l.bf16 %v28
  %v45 = vunpack.c.l.bf16 %v29
  %v46 = vunpack.c.l.bf16 %v30
  %v47 = vunpack.c.l.bf16 %v31
  %v48 = vunpack.c.l.bf16 %v32
  %v49 = vunpack.c.l.bf16 %v33
  %v50 = vunpack.c.l.bf16 %v34
  %v51 = vunpack.c.l.bf16 %v35
  %v52 = vunpack.c.l.bf16 %v36
  %vm53 = vcmp.gt.f32.partialorder %v37, 0.0
  %vm54 = vcmp.gt.f32.partialorder %v38, 0.0
  %vm55 = vcmp.gt.f32.partialorder %v39, 0.0
  %vm56 = vcmp.gt.f32.partialorder %v40, 0.0
  %vm57 = vcmp.gt.f32.partialorder %v41, 0.0
  %vm58 = vcmp.gt.f32.partialorder %v42, 0.0
  %vm59 = vcmp.gt.f32.partialorder %v43, 0.0
  %vm60 = vcmp.gt.f32.partialorder %v44, 0.0
  %vm61 = vcmp.gt.f32.partialorder %v45, 0.0
  %vm62 = vcmp.gt.f32.partialorder %v46, 0.0
  %vm63 = vcmp.gt.f32.partialorder %v47, 0.0
  %vm64 = vcmp.gt.f32.partialorder %v48, 0.0
  %vm65 = vcmp.gt.f32.partialorder %v49, 0.0
  %vm66 = vcmp.gt.f32.partialorder %v50, 0.0
  %vm67 = vcmp.gt.f32.partialorder %v51, 0.0
  %vm68 = vcmp.gt.f32.partialorder %v52, 0.0
  %v69 = vmax.f32 %v37, 1e-38
  %v70 = vmax.f32 %v38, 1e-38
  %v71 = vmax.f32 %v39, 1e-38
  %v72 = vmax.f32 %v40, 1e-38
  %v73 = vmax.f32 %v41, 1e-38
  %v74 = vmax.f32 %v42, 1e-38
  %v75 = vmax.f32 %v43, 1e-38
  %v76 = vmax.f32 %v44, 1e-38
  %v77 = vmax.f32 %v45, 1e-38
  %v78 = vmax.f32 %v46, 1e-38
  %v79 = vmax.f32 %v47, 1e-38
  %v80 = vmax.f32 %v48, 1e-38
  %v81 = vmax.f32 %v49, 1e-38
  %v82 = vmax.f32 %v50, 1e-38
  %v83 = vmax.f32 %v51, 1e-38
  %v84 = vmax.f32 %v52, 1e-38
  %v85 = vlog2.pop %v69
  %v86 = vmul.f32 %v85, 0.6931472
  %v87 = vlog2.pop %v70
  %v88 = vmul.f32 %v87, 0.6931472
  %v89 = vlog2.pop %v71
  %v90 = vmul.f32 %v89, 0.6931472
  %v91 = vlog2.pop %v72
  %v92 = vmul.f32 %v91, 0.6931472
  %v93 = vlog2.pop %v73
  %v94 = vmul.f32 %v93, 0.6931472
  %v95 = vlog2.pop %v74
  %v96 = vmul.f32 %v95, 0.6931472
  %v97 = vlog2.pop %v75
  %v98 = vmul.f32 %v97, 0.6931472
  %v99 = vlog2.pop %v76
  %v100 = vmul.f32 %v99, 0.6931472
  %v101 = vlog2.pop %v77
  %v102 = vmul.f32 %v101, 0.6931472
  %v103 = vlog2.pop %v78
  %v104 = vmul.f32 %v103, 0.6931472
  %v105 = vlog2.pop %v79
  %v106 = vmul.f32 %v105, 0.6931472
  %v107 = vlog2.pop %v80
  %v108 = vmul.f32 %v107, 0.6931472
  %v109 = vlog2.pop %v81
  %v110 = vmul.f32 %v109, 0.6931472
  %v111 = vlog2.pop %v82
  %v112 = vmul.f32 %v111, 0.6931472
  %v113 = vlog2.pop %v83
  %v114 = vmul.f32 %v113, 0.6931472
  %v115 = vlog2.pop %v84
  %v116 = vmul.f32 %v115, 0.6931472
  %v117 = vrcp.pop 0.6931472
  %v118 = vmul.f32 %v86, %v117
  %v119 = vmul.f32 %v88, %v117
  %v120 = vmul.f32 %v90, %v117
  %v121 = vmul.f32 %v92, %v117
  %v122 = vmul.f32 %v94, %v117
  %v123 = vmul.f32 %v96, %v117
  %v124 = vmul.f32 %v98, %v117
  %v125 = vmul.f32 %v100, %v117
  %v126 = vmul.f32 %v102, %v117
  %v127 = vmul.f32 %v104, %v117
  %v128 = vmul.f32 %v106, %v117
  %v129 = vmul.f32 %v108, %v117
  %v130 = vmul.f32 %v110, %v117
  %v131 = vmul.f32 %v112, %v117
  %v132 = vmul.f32 %v114, %v117
  %v133 = vmul.f32 %v116, %v117
  %v134 = vsel %vm53, %v118, -1e+30
  %v135 = vsel %vm54, %v119, -1e+30
  %v136 = vsel %vm55, %v120, -1e+30
  %v137 = vsel %vm56, %v121, -1e+30
  %v138 = vsel %vm57, %v122, -1e+30
  %v139 = vsel %vm58, %v123, -1e+30
  %v140 = vsel %vm59, %v124, -1e+30
  %v141 = vsel %vm60, %v125, -1e+30
  %v142 = vsel %vm61, %v126, -1e+30
  %v143 = vsel %vm62, %v127, -1e+30
  %v144 = vsel %vm63, %v128, -1e+30
  %v145 = vsel %vm64, %v129, -1e+30
  %v146 = vsel %vm65, %v130, -1e+30
  %v147 = vsel %vm66, %v131, -1e+30
  %v148 = vsel %vm67, %v132, -1e+30
  %v149 = vsel %vm68, %v133, -1e+30
  %v150 = vld [vmem:[%s2] sm:$0xff]
  %v151 = vld [vmem:[%s2 + $0x8] sm:$0xff]
  %v152 = vld [vmem:[%s2 + $0x10] sm:$0xff]
  %v153 = vld [vmem:[%s2 + $0x18] sm:$0xff]
  %v154 = vld [vmem:[%s2 + $0x20] sm:$0xff]
  %v155 = vld [vmem:[%s2 + $0x28] sm:$0xff]
  %v156 = vld [vmem:[%s2 + $0x30] sm:$0xff]
  %v157 = vld [vmem:[%s2 + $0x38] sm:$0xff]
  %v158 = vld [vmem:[%s2 + $0x40] sm:$0xff]
  %v159 = vld [vmem:[%s2 + $0x48] sm:$0xff]
  %v160 = vld [vmem:[%s2 + $0x50] sm:$0xff]
  %v161 = vld [vmem:[%s2 + $0x58] sm:$0xff]
  %v162 = vld [vmem:[%s2 + $0x60] sm:$0xff]
  %v163 = vld [vmem:[%s2 + $0x68] sm:$0xff]
  %v164 = vld [vmem:[%s2 + $0x70] sm:$0xff]
  %v165 = vld [vmem:[%s2 + $0x78] sm:$0xff]
  %v166 = vld [vmem:[%s1] sm:$0x1]
  %168 = vset.pattern.permute.xlu0 0
  %169 = vperm.xlu0 %168, %v150
  %v170 = vpop.permute.xlu0 %169
  %173 = vset.pattern.permute.xlu0 0
  %174 = vperm.xlu0 %173, %v151
  %v175 = vpop.permute.xlu0 %174
  %178 = vset.pattern.permute.xlu0 0
  %179 = vperm.xlu0 %178, %v152
  %v180 = vpop.permute.xlu0 %179
  %183 = vset.pattern.permute.xlu0 0
  %184 = vperm.xlu0 %183, %v153
  %v185 = vpop.permute.xlu0 %184
  %188 = vset.pattern.permute.xlu0 0
  %189 = vperm.xlu0 %188, %v154
  %v190 = vpop.permute.xlu0 %189
  %193 = vset.pattern.permute.xlu0 0
  %194 = vperm.xlu0 %193, %v155
  %v195 = vpop.permute.xlu0 %194
  %198 = vset.pattern.permute.xlu0 0
  %199 = vperm.xlu0 %198, %v156
  %v200 = vpop.permute.xlu0 %199
  %203 = vset.pattern.permute.xlu0 0
  %204 = vperm.xlu0 %203, %v157
  %v205 = vpop.permute.xlu0 %204
  %208 = vset.pattern.permute.xlu0 0
  %209 = vperm.xlu0 %208, %v158
  %v210 = vpop.permute.xlu0 %209
  %213 = vset.pattern.permute.xlu0 0
  %214 = vperm.xlu0 %213, %v159
  %v215 = vpop.permute.xlu0 %214
  %218 = vset.pattern.permute.xlu0 0
  %219 = vperm.xlu0 %218, %v160
  %v220 = vpop.permute.xlu0 %219
  %223 = vset.pattern.permute.xlu0 0
  %224 = vperm.xlu0 %223, %v161
  %v225 = vpop.permute.xlu0 %224
  %228 = vset.pattern.permute.xlu0 0
  %229 = vperm.xlu0 %228, %v162
  %v230 = vpop.permute.xlu0 %229
  %233 = vset.pattern.permute.xlu0 0
  %234 = vperm.xlu0 %233, %v163
  %v235 = vpop.permute.xlu0 %234
  %238 = vset.pattern.permute.xlu0 0
  %239 = vperm.xlu0 %238, %v164
  %v240 = vpop.permute.xlu0 %239
  %243 = vset.pattern.permute.xlu0 0
  %244 = vperm.xlu0 %243, %v165
  %v245 = vpop.permute.xlu0 %244
  %v248 = vlaneseq
  %v249 = vshrl.u32 %v248, 7
  %v250 = vsub.s32 0, %v249
  %v251 = vrot.slane %v166, %v250
  %v253 = vadd.f32 %v170, %v251
  %v254 = vadd.f32 %v175, %v251
  %v255 = vadd.f32 %v180, %v251
  %v256 = vadd.f32 %v185, %v251
  %v257 = vadd.f32 %v190, %v251
  %v258 = vadd.f32 %v195, %v251
  %v259 = vadd.f32 %v200, %v251
  %v260 = vadd.f32 %v205, %v251
  %v261 = vadd.f32 %v210, %v251
  %v262 = vadd.f32 %v215, %v251
  %v263 = vadd.f32 %v220, %v251
  %v264 = vadd.f32 %v225, %v251
  %v265 = vadd.f32 %v230, %v251
  %v266 = vadd.f32 %v235, %v251
  %v267 = vadd.f32 %v240, %v251
  %v268 = vadd.f32 %v245, %v251
  %vm269 = vcmp.ge.f32.partialorder %v253, 0.0
  %vm270 = vcmp.ge.f32.partialorder %v254, 0.0
  %vm271 = vcmp.ge.f32.partialorder %v255, 0.0
  %vm272 = vcmp.ge.f32.partialorder %v256, 0.0
  %vm273 = vcmp.ge.f32.partialorder %v257, 0.0
  %vm274 = vcmp.ge.f32.partialorder %v258, 0.0
  %vm275 = vcmp.ge.f32.partialorder %v259, 0.0
  %vm276 = vcmp.ge.f32.partialorder %v260, 0.0
  %vm277 = vcmp.ge.f32.partialorder %v261, 0.0
  %vm278 = vcmp.ge.f32.partialorder %v262, 0.0
  %vm279 = vcmp.ge.f32.partialorder %v263, 0.0
  %vm280 = vcmp.ge.f32.partialorder %v264, 0.0
  %vm281 = vcmp.ge.f32.partialorder %v265, 0.0
  %vm282 = vcmp.ge.f32.partialorder %v266, 0.0
  %vm283 = vcmp.ge.f32.partialorder %v267, 0.0
  %vm284 = vcmp.ge.f32.partialorder %v268, 0.0
  %v285 = vmul.f32 %v253, 0.2
  %v286 = vmul.f32 %v254, 0.2
  %v287 = vmul.f32 %v255, 0.2
  %v288 = vmul.f32 %v256, 0.2
  %v289 = vmul.f32 %v257, 0.2
  %v290 = vmul.f32 %v258, 0.2
  %v291 = vmul.f32 %v259, 0.2
  %v292 = vmul.f32 %v260, 0.2
  %v293 = vmul.f32 %v261, 0.2
  %v294 = vmul.f32 %v262, 0.2
  %v295 = vmul.f32 %v263, 0.2
  %v296 = vmul.f32 %v264, 0.2
  %v297 = vmul.f32 %v265, 0.2
  %v298 = vmul.f32 %v266, 0.2
  %v299 = vmul.f32 %v267, 0.2
  %v300 = vmul.f32 %v268, 0.2
  %v301 = vsel %vm269, %v253, %v285
  %v302 = vsel %vm270, %v254, %v286
  %v303 = vsel %vm271, %v255, %v287
  %v304 = vsel %vm272, %v256, %v288
  %v305 = vsel %vm273, %v257, %v289
  %v306 = vsel %vm274, %v258, %v290
  %v307 = vsel %vm275, %v259, %v291
  %v308 = vsel %vm276, %v260, %v292
  %v309 = vsel %vm277, %v261, %v293
  %v310 = vsel %vm278, %v262, %v294
  %v311 = vsel %vm279, %v263, %v295
  %v312 = vsel %vm280, %v264, %v296
  %v313 = vsel %vm281, %v265, %v297
  %v314 = vsel %vm282, %v266, %v298
  %v315 = vsel %vm283, %v267, %v299
  %v316 = vsel %vm284, %v268, %v300
  %v317 = vadd.f32 %v301, %v134
  %v318 = vadd.f32 %v302, %v135
  %v319 = vadd.f32 %v303, %v136
  %v320 = vadd.f32 %v304, %v137
  %v321 = vadd.f32 %v305, %v138
  %v322 = vadd.f32 %v306, %v139
  %v323 = vadd.f32 %v307, %v140
  %v324 = vadd.f32 %v308, %v141
  %v325 = vadd.f32 %v309, %v142
  %v326 = vadd.f32 %v310, %v143
  %v327 = vadd.f32 %v311, %v144
  %v328 = vadd.f32 %v312, %v145
  %v329 = vadd.f32 %v313, %v146
  %v330 = vadd.f32 %v314, %v147
  %v331 = vadd.f32 %v315, %v148
  %v332 = vadd.f32 %v316, %v149
  %333 = vmax.xlane.f32.xlu0 %v317
  %v334 = vpop.xlane.xlu0 %333
  %335 = vmax.xlane.f32.xlu0 %v318
  %v336 = vpop.xlane.xlu0 %335
  %337 = vmax.xlane.f32.xlu0 %v319
  %v338 = vpop.xlane.xlu0 %337
  %339 = vmax.xlane.f32.xlu0 %v320
  %v340 = vpop.xlane.xlu0 %339
  %341 = vmax.xlane.f32.xlu0 %v321
  %v342 = vpop.xlane.xlu0 %341
  %343 = vmax.xlane.f32.xlu0 %v322
  %v344 = vpop.xlane.xlu0 %343
  %345 = vmax.xlane.f32.xlu0 %v323
  %v346 = vpop.xlane.xlu0 %345
  %347 = vmax.xlane.f32.xlu0 %v324
  %v348 = vpop.xlane.xlu0 %347
  %349 = vmax.xlane.f32.xlu0 %v325
  %v350 = vpop.xlane.xlu0 %349
  %351 = vmax.xlane.f32.xlu0 %v326
  %v352 = vpop.xlane.xlu0 %351
  %353 = vmax.xlane.f32.xlu0 %v327
  %v354 = vpop.xlane.xlu0 %353
  %355 = vmax.xlane.f32.xlu0 %v328
  %v356 = vpop.xlane.xlu0 %355
  %357 = vmax.xlane.f32.xlu0 %v329
  %v358 = vpop.xlane.xlu0 %357
  %359 = vmax.xlane.f32.xlu0 %v330
  %v360 = vpop.xlane.xlu0 %359
  %361 = vmax.xlane.f32.xlu0 %v331
  %v362 = vpop.xlane.xlu0 %361
  %363 = vmax.xlane.f32.xlu0 %v332
  %v364 = vpop.xlane.xlu0 %363
  %v365 = vsub.f32 %v317, %v334
  %v366 = vsub.f32 %v318, %v336
  %v367 = vsub.f32 %v319, %v338
  %v368 = vsub.f32 %v320, %v340
  %v369 = vsub.f32 %v321, %v342
  %v370 = vsub.f32 %v322, %v344
  %v371 = vsub.f32 %v323, %v346
  %v372 = vsub.f32 %v324, %v348
  %v373 = vsub.f32 %v325, %v350
  %v374 = vsub.f32 %v326, %v352
  %v375 = vsub.f32 %v327, %v354
  %v376 = vsub.f32 %v328, %v356
  %v377 = vsub.f32 %v329, %v358
  %v378 = vsub.f32 %v330, %v360
  %v379 = vsub.f32 %v331, %v362
  %v380 = vsub.f32 %v332, %v364
  %v381 = vmul.f32 %v365, 1.442695
  %v382 = vpow.pop %v381
  %v383 = vmul.f32 %v366, 1.442695
  %v384 = vpow.pop %v383
  %v385 = vmul.f32 %v367, 1.442695
  %v386 = vpow.pop %v385
  %v387 = vmul.f32 %v368, 1.442695
  %v388 = vpow.pop %v387
  %v389 = vmul.f32 %v369, 1.442695
  %v390 = vpow.pop %v389
  %v391 = vmul.f32 %v370, 1.442695
  %v392 = vpow.pop %v391
  %v393 = vmul.f32 %v371, 1.442695
  %v394 = vpow.pop %v393
  %v395 = vmul.f32 %v372, 1.442695
  %v396 = vpow.pop %v395
  %v397 = vmul.f32 %v373, 1.442695
  %v398 = vpow.pop %v397
  %v399 = vmul.f32 %v374, 1.442695
  %v400 = vpow.pop %v399
  %v401 = vmul.f32 %v375, 1.442695
  %v402 = vpow.pop %v401
  %v403 = vmul.f32 %v376, 1.442695
  %v404 = vpow.pop %v403
  %v405 = vmul.f32 %v377, 1.442695
  %v406 = vpow.pop %v405
  %v407 = vmul.f32 %v378, 1.442695
  %v408 = vpow.pop %v407
  %v409 = vmul.f32 %v379, 1.442695
  %v410 = vpow.pop %v409
  %v411 = vmul.f32 %v380, 1.442695
  %v412 = vpow.pop %v411
  %413 = vadd.xlane.f32.xlu0 %v382
  %v414 = vpop.xlane.xlu0 %413
  %415 = vadd.xlane.f32.xlu0 %v384
  %v416 = vpop.xlane.xlu0 %415
  %417 = vadd.xlane.f32.xlu0 %v386
  %v418 = vpop.xlane.xlu0 %417
  %419 = vadd.xlane.f32.xlu0 %v388
  %v420 = vpop.xlane.xlu0 %419
  %421 = vadd.xlane.f32.xlu0 %v390
  %v422 = vpop.xlane.xlu0 %421
  %423 = vadd.xlane.f32.xlu0 %v392
  %v424 = vpop.xlane.xlu0 %423
  %425 = vadd.xlane.f32.xlu0 %v394
  %v426 = vpop.xlane.xlu0 %425
  %427 = vadd.xlane.f32.xlu0 %v396
  %v428 = vpop.xlane.xlu0 %427
  %429 = vadd.xlane.f32.xlu0 %v398
  %v430 = vpop.xlane.xlu0 %429
  %431 = vadd.xlane.f32.xlu0 %v400
  %v432 = vpop.xlane.xlu0 %431
  %433 = vadd.xlane.f32.xlu0 %v402
  %v434 = vpop.xlane.xlu0 %433
  %435 = vadd.xlane.f32.xlu0 %v404
  %v436 = vpop.xlane.xlu0 %435
  %437 = vadd.xlane.f32.xlu0 %v406
  %v438 = vpop.xlane.xlu0 %437
  %439 = vadd.xlane.f32.xlu0 %v408
  %v440 = vpop.xlane.xlu0 %439
  %441 = vadd.xlane.f32.xlu0 %v410
  %v442 = vpop.xlane.xlu0 %441
  %443 = vadd.xlane.f32.xlu0 %v412
  %v444 = vpop.xlane.xlu0 %443
  %v445 = vpack.c.bf16 %v384, %v382
  %v446 = vpack.c.bf16 %v388, %v386
  %v447 = vpack.c.bf16 %v392, %v390
  %v448 = vpack.c.bf16 %v396, %v394
  %v449 = vpack.c.bf16 %v400, %v398
  %v450 = vpack.c.bf16 %v404, %v402
  %v451 = vpack.c.bf16 %v408, %v406
  %v452 = vpack.c.bf16 %v412, %v410
  %v453 = vld [vmem:[%s0] sm:$0xf]
  %v454 = vld [vmem:[%s0 + $0x4] sm:$0xf]
  %v455 = vld [vmem:[%s0 + $0x8] sm:$0xf]
  %v456 = vld [vmem:[%s0 + $0xc] sm:$0xf]
  %v457 = vld [vmem:[%s0 + $0x10] sm:$0xf]
  %v458 = vld [vmem:[%s0 + $0x14] sm:$0xf]
  %v459 = vld [vmem:[%s0 + $0x18] sm:$0xf]
  %v460 = vld [vmem:[%s0 + $0x1c] sm:$0xf]
  %v461 = vld [vmem:[%s0 + $0x20] sm:$0xf]
  %v462 = vld [vmem:[%s0 + $0x24] sm:$0xf]
  %v463 = vld [vmem:[%s0 + $0x28] sm:$0xf]
  %v464 = vld [vmem:[%s0 + $0x2c] sm:$0xf]
  %v465 = vld [vmem:[%s0 + $0x30] sm:$0xf]
  %v466 = vld [vmem:[%s0 + $0x34] sm:$0xf]
  %v467 = vld [vmem:[%s0 + $0x38] sm:$0xf]
  %v468 = vld [vmem:[%s0 + $0x3c] sm:$0xf]
  %v485 = vunpack.c.l.b16 %v453
  %v486 = vunpack.c.l.b16 %v454
  %v487 = vunpack.c.l.b16 %v455
  %v488 = vunpack.c.l.b16 %v456
  %v489 = vunpack.c.l.b16 %v457
  %v490 = vunpack.c.l.b16 %v458
  %v491 = vunpack.c.l.b16 %v459
  %v492 = vunpack.c.l.b16 %v460
  %v493 = vunpack.c.l.b16 %v461
  %v494 = vunpack.c.l.b16 %v462
  %v495 = vunpack.c.l.b16 %v463
  %v496 = vunpack.c.l.b16 %v464
  %v497 = vunpack.c.l.b16 %v465
  %v498 = vunpack.c.l.b16 %v466
  %v499 = vunpack.c.l.b16 %v467
  %v500 = vunpack.c.l.b16 %v468
  %v501 = vpack.c.b16 %v486, %v485
  %v502 = vpack.c.b16 %v488, %v487
  %v503 = vpack.c.b16 %v490, %v489
  %v504 = vpack.c.b16 %v492, %v491
  %v505 = vpack.c.b16 %v494, %v493
  %v506 = vpack.c.b16 %v496, %v495
  %v507 = vpack.c.b16 %v498, %v497
  %v508 = vpack.c.b16 %v500, %v499
  %517 = vmatprep.subr.bf16.mxu0 0
  %518 = vmatpush1.bf16.msra.mxu0 %v508
  %519 = vmatprep.subr.bf16.mxu0 0
  %520 = vmatpush1.bf16.msra.mxu0 %v507
  %521 = vmatprep.subr.bf16.mxu0 0
  %522 = vmatpush1.bf16.msra.mxu0 %v506
  %523 = vmatprep.subr.bf16.mxu0 0
  %524 = vmatpush1.bf16.msra.mxu0 %v505
  %525 = vmatprep.subr.bf16.mxu0 0
  %526 = vmatpush1.bf16.msra.mxu0 %v504
  %527 = vmatprep.subr.bf16.mxu0 0
  %528 = vmatpush1.bf16.msra.mxu0 %v503
  %529 = vmatprep.subr.bf16.mxu0 0
  %530 = vmatpush1.bf16.msra.mxu0 %v502
  %531 = vmatprep.subr.bf16.mxu0 0
  %532 = vmatpush1.bf16.msra.mxu0 %v501
  %533 = vmatprep.subr.bf16.mxu0 0
  %534 = vmatpush2.bf16.msra.mxu0 0
  %535 = vmatprep.subr.bf16.mxu0 0
  %536 = vmatpush2.bf16.msra.mxu0 0
  %537 = vmatprep.subr.bf16.mxu0 0
  %538 = vmatpush2.bf16.msra.mxu0 0
  %539 = vmatprep.subr.bf16.mxu0 0
  %540 = vmatpush2.bf16.msra.mxu0 0
  %541 = vmatprep.subr.bf16.mxu0 0
  %542 = vmatpush2.bf16.msra.mxu0 0
  %543 = vmatprep.subr.bf16.mxu0 0
  %544 = vmatpush2.bf16.msra.mxu0 0
  %545 = vmatprep.subr.bf16.mxu0 0
  %546 = vmatpush2.bf16.msra.mxu0 0
  %547 = vmatprep.subr.bf16.mxu0 0
  %548 = vmatpush2.bf16.msra.mxu0 0
  %549 = vmatprep.mubr.bf16.mxu0 0
  %550 = vmatmul.mubr.bf16.gmra.mxu0 %v445
  %v551 = vpop.f32.mrf.mxu0
  %v552 = vadd.f32 0.0, %v551
  %v553 = vpop.f32.mrf.mxu0
  %v554 = vpop.f32.mrf.mxu0
  %v555 = vadd.f32 0.0, %v554
  %v556 = vpop.f32.mrf.mxu0
  %557 = vmatprep.mubr.bf16.mxu0 0
  %558 = vmatmul.mubr.bf16.gmra.mxu0 %v446
  %v559 = vpop.f32.mrf.mxu0
  %v560 = vadd.f32 0.0, %v559
  %v561 = vpop.f32.mrf.mxu0
  %v562 = vpop.f32.mrf.mxu0
  %v563 = vadd.f32 0.0, %v562
  %v564 = vpop.f32.mrf.mxu0
  %565 = vmatprep.mubr.bf16.mxu0 0
  %566 = vmatmul.mubr.bf16.gmra.mxu0 %v447
  %v567 = vpop.f32.mrf.mxu0
  %v568 = vadd.f32 0.0, %v567
  %v569 = vpop.f32.mrf.mxu0
  %v570 = vpop.f32.mrf.mxu0
  %v571 = vadd.f32 0.0, %v570
  %v572 = vpop.f32.mrf.mxu0
  %573 = vmatprep.mubr.bf16.mxu0 0
  %574 = vmatmul.mubr.bf16.gmra.mxu0 %v448
  %v575 = vpop.f32.mrf.mxu0
  %v576 = vadd.f32 0.0, %v575
  %v577 = vpop.f32.mrf.mxu0
  %v578 = vpop.f32.mrf.mxu0
  %v579 = vadd.f32 0.0, %v578
  %v580 = vpop.f32.mrf.mxu0
  %581 = vmatprep.mubr.bf16.mxu0 0
  %582 = vmatmul.mubr.bf16.gmra.mxu0 %v449
  %v583 = vpop.f32.mrf.mxu0
  %v584 = vadd.f32 0.0, %v583
  %v585 = vpop.f32.mrf.mxu0
  %v586 = vpop.f32.mrf.mxu0
  %v587 = vadd.f32 0.0, %v586
  %v588 = vpop.f32.mrf.mxu0
  %589 = vmatprep.mubr.bf16.mxu0 0
  %590 = vmatmul.mubr.bf16.gmra.mxu0 %v450
  %v591 = vpop.f32.mrf.mxu0
  %v592 = vadd.f32 0.0, %v591
  %v593 = vpop.f32.mrf.mxu0
  %v594 = vpop.f32.mrf.mxu0
  %v595 = vadd.f32 0.0, %v594
  %v596 = vpop.f32.mrf.mxu0
  %597 = vmatprep.mubr.bf16.mxu0 0
  %598 = vmatmul.mubr.bf16.gmra.mxu0 %v451
  %v599 = vpop.f32.mrf.mxu0
  %v600 = vadd.f32 0.0, %v599
  %v601 = vpop.f32.mrf.mxu0
  %v602 = vpop.f32.mrf.mxu0
  %v603 = vadd.f32 0.0, %v602
  %v604 = vpop.f32.mrf.mxu0
  %605 = vmatprep.mubr.bf16.mxu0 0
  %606 = vmatmul.mubr.bf16.gmra.mxu0 %v452
  %v607 = vpop.f32.mrf.mxu0
  %v608 = vadd.f32 0.0, %v607
  %v609 = vpop.f32.mrf.mxu0
  %v610 = vpop.f32.mrf.mxu0
  %v611 = vadd.f32 0.0, %v610
  %v612 = vpop.f32.mrf.mxu0
  %613 = vdwg.mxu0
  %v614 = vrcp.pop %v414
  %v615 = vrcp.pop %v416
  %v616 = vrcp.pop %v418
  %v617 = vrcp.pop %v420
  %v618 = vrcp.pop %v422
  %v619 = vrcp.pop %v424
  %v620 = vrcp.pop %v426
  %v621 = vrcp.pop %v428
  %v622 = vrcp.pop %v430
  %v623 = vrcp.pop %v432
  %v624 = vrcp.pop %v434
  %v625 = vrcp.pop %v436
  %v626 = vrcp.pop %v438
  %v627 = vrcp.pop %v440
  %v628 = vrcp.pop %v442
  %v629 = vrcp.pop %v444
  %v630 = vmul.f32 %v552, %v614
  %v631 = vmul.f32 %v555, %v615
  %v632 = vmul.f32 %v560, %v616
  %v633 = vmul.f32 %v563, %v617
  %v634 = vmul.f32 %v568, %v618
  %v635 = vmul.f32 %v571, %v619
  %v636 = vmul.f32 %v576, %v620
  %v637 = vmul.f32 %v579, %v621
  %v638 = vmul.f32 %v584, %v622
  %v639 = vmul.f32 %v587, %v623
  %v640 = vmul.f32 %v592, %v624
  %v641 = vmul.f32 %v595, %v625
  %v642 = vmul.f32 %v600, %v626
  %v643 = vmul.f32 %v603, %v627
  %v644 = vmul.f32 %v608, %v628
  %v645 = vmul.f32 %v611, %v629
  %v646 = vld [vmem:[%s3] sm:$0x1]
  %v648 = vlaneseq
  %v649 = vshrl.u32 %v648, 7
  %v650 = vsub.s32 0, %v649
  %v651 = vrot.slane %v646, %v650
  %v653 = vadd.f32 %v630, %v651
  %v654 = vadd.f32 %v631, %v651
  %v655 = vadd.f32 %v632, %v651
  %v656 = vadd.f32 %v633, %v651
  %v657 = vadd.f32 %v634, %v651
  %v658 = vadd.f32 %v635, %v651
  %v659 = vadd.f32 %v636, %v651
  %v660 = vadd.f32 %v637, %v651
  %v661 = vadd.f32 %v638, %v651
  %v662 = vadd.f32 %v639, %v651
  %v663 = vadd.f32 %v640, %v651
  %v664 = vadd.f32 %v641, %v651
  %v665 = vadd.f32 %v642, %v651
  %v666 = vadd.f32 %v643, %v651
  %v667 = vadd.f32 %v644, %v651
  %v668 = vadd.f32 %v645, %v651
  %669 = vst [vmem:[%s5] sm:$0xff] %v653
  %670 = vst [vmem:[%s5 + $0x8] sm:$0xff] %v654
  %671 = vst [vmem:[%s5 + $0x10] sm:$0xff] %v655
  %672 = vst [vmem:[%s5 + $0x18] sm:$0xff] %v656
  %673 = vst [vmem:[%s5 + $0x20] sm:$0xff] %v657
  %674 = vst [vmem:[%s5 + $0x28] sm:$0xff] %v658
  %675 = vst [vmem:[%s5 + $0x30] sm:$0xff] %v659
  %676 = vst [vmem:[%s5 + $0x38] sm:$0xff] %v660
  %677 = vst [vmem:[%s5 + $0x40] sm:$0xff] %v661
  %678 = vst [vmem:[%s5 + $0x48] sm:$0xff] %v662
  %679 = vst [vmem:[%s5 + $0x50] sm:$0xff] %v663
  %680 = vst [vmem:[%s5 + $0x58] sm:$0xff] %v664
  %681 = vst [vmem:[%s5 + $0x60] sm:$0xff] %v665
  %682 = vst [vmem:[%s5 + $0x68] sm:$0xff] %v666
  %683 = vst [vmem:[%s5 + $0x70] sm:$0xff] %v667
  %684 = vst [vmem:[%s5 + $0x78] sm:$0xff] %v668
  // Predicated region
  $region22: #{gat_forward.3} parent=0 // pred_check
    _
  $region23: #{gat_forward.3} parent=0 // pred_check_branch
    %686 = sbr.rel (0) target = $region25
  $region24: #{gat_forward.3} parent=0 // pred_region
    _
  $region25: #{gat_forward.3} parent=0 // pred_fallthru
    _
  // Predicated region
  $region26: #{gat_forward.3} parent=0 // pred_check
    _
  $region27: #{gat_forward.3} parent=0 // pred_check_branch
    %688 = sbr.rel (0) target = $region29
  $region28: #{gat_forward.3} parent=0 // pred_region
    _
  $region29: #{gat_forward.3} parent=0 // pred_fallthru
    _

// kernel: gat_forward.2
$region0: #{gat_forward.2}
  #allocation0 [shape = 'u32[]', space=smem, size = 0x4, offset = 0x4, fixed_abs, tag = 'smem constant byte address 0x4 - core index']
  #allocation1 [shape = 'u32[144,128]{1,0:T(1,128)}', space=vmem, size = 0x12000, scoped, tag = 'internal scratch']
  %s0 = inlined_call_operand.vmem [shape: bf16[128,128], index: 0, kind: input, shape index: {}]
  %s1 = inlined_call_operand.vmem [shape: f32[1,128], index: 1, kind: input, shape index: {}]
  %s2 = inlined_call_operand.vmem [shape: f32[128,1], index: 2, kind: input, shape index: {}]
  %s3 = inlined_call_operand.vmem [shape: f32[1,128], index: 3, kind: input, shape index: {}]
  %s4 = inlined_call_operand.vmem [shape: bf16[128,128], index: 4, kind: input, shape index: {}]
  %s5 = inlined_call_operand.vmem [shape: bf16[128,128], index: 5, kind: output, shape index: {}]
  %s6 = sld [smem:[#allocation0]]
  $region30: #{gat_forward.2} parent=0
    _
  %s8 = ssub.s32 1, %s6
  %s9 = scalar_select 0, %s8, %s6
  // Predicated region
  $region2: #{gat_forward.2} parent=0 // pred_check
    _
  $region3: #{gat_forward.2} parent=0 // pred_check_branch
    %11 = sbr.rel (0) target = $region5
  $region4: #{gat_forward.2} parent=0 // pred_region
    _
  $region5: #{gat_forward.2} parent=0 // pred_fallthru
    _
  // Predicated region
  $region6: #{gat_forward.2} parent=0 // pred_check
    _
  $region7: #{gat_forward.2} parent=0 // pred_check_branch
    %13 = sbr.rel (0) target = $region9
  $region8: #{gat_forward.2} parent=0 // pred_region
    _
  $region9: #{gat_forward.2} parent=0 // pred_fallthru
    _
  // Predicated region
  $region10: #{gat_forward.2} parent=0 // pred_check
    _
  $region11: #{gat_forward.2} parent=0 // pred_check_branch
    %15 = sbr.rel (0) target = $region13
  $region12: #{gat_forward.2} parent=0 // pred_region
    _
  $region13: #{gat_forward.2} parent=0 // pred_fallthru
    _
  // Predicated region
  $region14: #{gat_forward.2} parent=0 // pred_check
    _
  $region15: #{gat_forward.2} parent=0 // pred_check_branch
    %17 = sbr.rel (0) target = $region17
  $region16: #{gat_forward.2} parent=0 // pred_region
    _
  $region17: #{gat_forward.2} parent=0 // pred_fallthru
    _
  // Predicated region
  $region18: #{gat_forward.2} parent=0 // pred_check
    _
  $region19: #{gat_forward.2} parent=0 // pred_check_branch
    %19 = sbr.rel (0) target = $region21
  $region20: #{gat_forward.2} parent=0 // pred_region
    _
  $region21: #{gat_forward.2} parent=0 // pred_fallthru
    _
  %v21 = vld [vmem:[%s4] sm:$0xf]
  %v22 = vld [vmem:[%s4 + $0x4] sm:$0xf]
  %v23 = vld [vmem:[%s4 + $0x8] sm:$0xf]
  %v24 = vld [vmem:[%s4 + $0xc] sm:$0xf]
  %v25 = vld [vmem:[%s4 + $0x10] sm:$0xf]
  %v26 = vld [vmem:[%s4 + $0x14] sm:$0xf]
  %v27 = vld [vmem:[%s4 + $0x18] sm:$0xf]
  %v28 = vld [vmem:[%s4 + $0x1c] sm:$0xf]
  %v29 = vld [vmem:[%s4 + $0x20] sm:$0xf]
  %v30 = vld [vmem:[%s4 + $0x24] sm:$0xf]
  %v31 = vld [vmem:[%s4 + $0x28] sm:$0xf]
  %v32 = vld [vmem:[%s4 + $0x2c] sm:$0xf]
  %v33 = vld [vmem:[%s4 + $0x30] sm:$0xf]
  %v34 = vld [vmem:[%s4 + $0x34] sm:$0xf]
  %v35 = vld [vmem:[%s4 + $0x38] sm:$0xf]
  %v36 = vld [vmem:[%s4 + $0x3c] sm:$0xf]
  %v37 = vunpack.c.l.bf16 %v21
  %v38 = vunpack.c.l.bf16 %v22
  %v39 = vunpack.c.l.bf16 %v23
  %v40 = vunpack.c.l.bf16 %v24
  %v41 = vunpack.c.l.bf16 %v25
  %v42 = vunpack.c.l.bf16 %v26
  %v43 = vunpack.c.l.bf16 %v27
  %v44 = vunpack.c.l.bf16 %v28
  %v45 = vunpack.c.l.bf16 %v29
  %v46 = vunpack.c.l.bf16 %v30
  %v47 = vunpack.c.l.bf16 %v31
  %v48 = vunpack.c.l.bf16 %v32
  %v49 = vunpack.c.l.bf16 %v33
  %v50 = vunpack.c.l.bf16 %v34
  %v51 = vunpack.c.l.bf16 %v35
  %v52 = vunpack.c.l.bf16 %v36
  %vm53 = vcmp.gt.f32.partialorder %v37, 0.0
  %vm54 = vcmp.gt.f32.partialorder %v38, 0.0
  %vm55 = vcmp.gt.f32.partialorder %v39, 0.0
  %vm56 = vcmp.gt.f32.partialorder %v40, 0.0
  %vm57 = vcmp.gt.f32.partialorder %v41, 0.0
  %vm58 = vcmp.gt.f32.partialorder %v42, 0.0
  %vm59 = vcmp.gt.f32.partialorder %v43, 0.0
  %vm60 = vcmp.gt.f32.partialorder %v44, 0.0
  %vm61 = vcmp.gt.f32.partialorder %v45, 0.0
  %vm62 = vcmp.gt.f32.partialorder %v46, 0.0
  %vm63 = vcmp.gt.f32.partialorder %v47, 0.0
  %vm64 = vcmp.gt.f32.partialorder %v48, 0.0
  %vm65 = vcmp.gt.f32.partialorder %v49, 0.0
  %vm66 = vcmp.gt.f32.partialorder %v50, 0.0
  %vm67 = vcmp.gt.f32.partialorder %v51, 0.0
  %vm68 = vcmp.gt.f32.partialorder %v52, 0.0
  %v69 = vmax.f32 %v37, 1e-38
  %v70 = vmax.f32 %v38, 1e-38
  %v71 = vmax.f32 %v39, 1e-38
  %v72 = vmax.f32 %v40, 1e-38
  %v73 = vmax.f32 %v41, 1e-38
  %v74 = vmax.f32 %v42, 1e-38
  %v75 = vmax.f32 %v43, 1e-38
  %v76 = vmax.f32 %v44, 1e-38
  %v77 = vmax.f32 %v45, 1e-38
  %v78 = vmax.f32 %v46, 1e-38
  %v79 = vmax.f32 %v47, 1e-38
  %v80 = vmax.f32 %v48, 1e-38
  %v81 = vmax.f32 %v49, 1e-38
  %v82 = vmax.f32 %v50, 1e-38
  %v83 = vmax.f32 %v51, 1e-38
  %v84 = vmax.f32 %v52, 1e-38
  %v85 = vlog2.pop %v69
  %v86 = vmul.f32 %v85, 0.6931472
  %v87 = vlog2.pop %v70
  %v88 = vmul.f32 %v87, 0.6931472
  %v89 = vlog2.pop %v71
  %v90 = vmul.f32 %v89, 0.6931472
  %v91 = vlog2.pop %v72
  %v92 = vmul.f32 %v91, 0.6931472
  %v93 = vlog2.pop %v73
  %v94 = vmul.f32 %v93, 0.6931472
  %v95 = vlog2.pop %v74
  %v96 = vmul.f32 %v95, 0.6931472
  %v97 = vlog2.pop %v75
  %v98 = vmul.f32 %v97, 0.6931472
  %v99 = vlog2.pop %v76
  %v100 = vmul.f32 %v99, 0.6931472
  %v101 = vlog2.pop %v77
  %v102 = vmul.f32 %v101, 0.6931472
  %v103 = vlog2.pop %v78
  %v104 = vmul.f32 %v103, 0.6931472
  %v105 = vlog2.pop %v79
  %v106 = vmul.f32 %v105, 0.6931472
  %v107 = vlog2.pop %v80
  %v108 = vmul.f32 %v107, 0.6931472
  %v109 = vlog2.pop %v81
  %v110 = vmul.f32 %v109, 0.6931472
  %v111 = vlog2.pop %v82
  %v112 = vmul.f32 %v111, 0.6931472
  %v113 = vlog2.pop %v83
  %v114 = vmul.f32 %v113, 0.6931472
  %v115 = vlog2.pop %v84
  %v116 = vmul.f32 %v115, 0.6931472
  %v117 = vrcp.pop 0.6931472
  %v118 = vmul.f32 %v86, %v117
  %v119 = vmul.f32 %v88, %v117
  %v120 = vmul.f32 %v90, %v117
  %v121 = vmul.f32 %v92, %v117
  %v122 = vmul.f32 %v94, %v117
  %v123 = vmul.f32 %v96, %v117
  %v124 = vmul.f32 %v98, %v117
  %v125 = vmul.f32 %v100, %v117
  %v126 = vmul.f32 %v102, %v117
  %v127 = vmul.f32 %v104, %v117
  %v128 = vmul.f32 %v106, %v117
  %v129 = vmul.f32 %v108, %v117
  %v130 = vmul.f32 %v110, %v117
  %v131 = vmul.f32 %v112, %v117
  %v132 = vmul.f32 %v114, %v117
  %v133 = vmul.f32 %v116, %v117
  %v134 = vsel %vm53, %v118, -1e+30
  %v135 = vsel %vm54, %v119, -1e+30
  %v136 = vsel %vm55, %v120, -1e+30
  %v137 = vsel %vm56, %v121, -1e+30
  %v138 = vsel %vm57, %v122, -1e+30
  %v139 = vsel %vm58, %v123, -1e+30
  %v140 = vsel %vm59, %v124, -1e+30
  %v141 = vsel %vm60, %v125, -1e+30
  %v142 = vsel %vm61, %v126, -1e+30
  %v143 = vsel %vm62, %v127, -1e+30
  %v144 = vsel %vm63, %v128, -1e+30
  %v145 = vsel %vm64, %v129, -1e+30
  %v146 = vsel %vm65, %v130, -1e+30
  %v147 = vsel %vm66, %v131, -1e+30
  %v148 = vsel %vm67, %v132, -1e+30
  %v149 = vsel %vm68, %v133, -1e+30
  %v150 = vld [vmem:[%s2] sm:$0xff]
  %v151 = vld [vmem:[%s2 + $0x8] sm:$0xff]
  %v152 = vld [vmem:[%s2 + $0x10] sm:$0xff]
  %v153 = vld [vmem:[%s2 + $0x18] sm:$0xff]
  %v154 = vld [vmem:[%s2 + $0x20] sm:$0xff]
  %v155 = vld [vmem:[%s2 + $0x28] sm:$0xff]
  %v156 = vld [vmem:[%s2 + $0x30] sm:$0xff]
  %v157 = vld [vmem:[%s2 + $0x38] sm:$0xff]
  %v158 = vld [vmem:[%s2 + $0x40] sm:$0xff]
  %v159 = vld [vmem:[%s2 + $0x48] sm:$0xff]
  %v160 = vld [vmem:[%s2 + $0x50] sm:$0xff]
  %v161 = vld [vmem:[%s2 + $0x58] sm:$0xff]
  %v162 = vld [vmem:[%s2 + $0x60] sm:$0xff]
  %v163 = vld [vmem:[%s2 + $0x68] sm:$0xff]
  %v164 = vld [vmem:[%s2 + $0x70] sm:$0xff]
  %v165 = vld [vmem:[%s2 + $0x78] sm:$0xff]
  %v166 = vld [vmem:[%s1] sm:$0x1]
  %168 = vset.pattern.permute.xlu0 0
  %169 = vperm.xlu0 %168, %v150
  %v170 = vpop.permute.xlu0 %169
  %173 = vset.pattern.permute.xlu0 0
  %174 = vperm.xlu0 %173, %v151
  %v175 = vpop.permute.xlu0 %174
  %178 = vset.pattern.permute.xlu0 0
  %179 = vperm.xlu0 %178, %v152
  %v180 = vpop.permute.xlu0 %179
  %183 = vset.pattern.permute.xlu0 0
  %184 = vperm.xlu0 %183, %v153
  %v185 = vpop.permute.xlu0 %184
  %188 = vset.pattern.permute.xlu0 0
  %189 = vperm.xlu0 %188, %v154
  %v190 = vpop.permute.xlu0 %189
  %193 = vset.pattern.permute.xlu0 0
  %194 = vperm.xlu0 %193, %v155
  %v195 = vpop.permute.xlu0 %194
  %198 = vset.pattern.permute.xlu0 0
  %199 = vperm.xlu0 %198, %v156
  %v200 = vpop.permute.xlu0 %199
  %203 = vset.pattern.permute.xlu0 0
  %204 = vperm.xlu0 %203, %v157
  %v205 = vpop.permute.xlu0 %204
  %208 = vset.pattern.permute.xlu0 0
  %209 = vperm.xlu0 %208, %v158
  %v210 = vpop.permute.xlu0 %209
  %213 = vset.pattern.permute.xlu0 0
  %214 = vperm.xlu0 %213, %v159
  %v215 = vpop.permute.xlu0 %214
  %218 = vset.pattern.permute.xlu0 0
  %219 = vperm.xlu0 %218, %v160
  %v220 = vpop.permute.xlu0 %219
  %223 = vset.pattern.permute.xlu0 0
  %224 = vperm.xlu0 %223, %v161
  %v225 = vpop.permute.xlu0 %224
  %228 = vset.pattern.permute.xlu0 0
  %229 = vperm.xlu0 %228, %v162
  %v230 = vpop.permute.xlu0 %229
  %233 = vset.pattern.permute.xlu0 0
  %234 = vperm.xlu0 %233, %v163
  %v235 = vpop.permute.xlu0 %234
  %238 = vset.pattern.permute.xlu0 0
  %239 = vperm.xlu0 %238, %v164
  %v240 = vpop.permute.xlu0 %239
  %243 = vset.pattern.permute.xlu0 0
  %244 = vperm.xlu0 %243, %v165
  %v245 = vpop.permute.xlu0 %244
  %v248 = vlaneseq
  %v249 = vshrl.u32 %v248, 7
  %v250 = vsub.s32 0, %v249
  %v251 = vrot.slane %v166, %v250
  %v253 = vadd.f32 %v170, %v251
  %v254 = vadd.f32 %v175, %v251
  %v255 = vadd.f32 %v180, %v251
  %v256 = vadd.f32 %v185, %v251
  %v257 = vadd.f32 %v190, %v251
  %v258 = vadd.f32 %v195, %v251
  %v259 = vadd.f32 %v200, %v251
  %v260 = vadd.f32 %v205, %v251
  %v261 = vadd.f32 %v210, %v251
  %v262 = vadd.f32 %v215, %v251
  %v263 = vadd.f32 %v220, %v251
  %v264 = vadd.f32 %v225, %v251
  %v265 = vadd.f32 %v230, %v251
  %v266 = vadd.f32 %v235, %v251
  %v267 = vadd.f32 %v240, %v251
  %v268 = vadd.f32 %v245, %v251
  %vm269 = vcmp.ge.f32.partialorder %v253, 0.0
  %vm270 = vcmp.ge.f32.partialorder %v254, 0.0
  %vm271 = vcmp.ge.f32.partialorder %v255, 0.0
  %vm272 = vcmp.ge.f32.partialorder %v256, 0.0
  %vm273 = vcmp.ge.f32.partialorder %v257, 0.0
  %vm274 = vcmp.ge.f32.partialorder %v258, 0.0
  %vm275 = vcmp.ge.f32.partialorder %v259, 0.0
  %vm276 = vcmp.ge.f32.partialorder %v260, 0.0
  %vm277 = vcmp.ge.f32.partialorder %v261, 0.0
  %vm278 = vcmp.ge.f32.partialorder %v262, 0.0
  %vm279 = vcmp.ge.f32.partialorder %v263, 0.0
  %vm280 = vcmp.ge.f32.partialorder %v264, 0.0
  %vm281 = vcmp.ge.f32.partialorder %v265, 0.0
  %vm282 = vcmp.ge.f32.partialorder %v266, 0.0
  %vm283 = vcmp.ge.f32.partialorder %v267, 0.0
  %vm284 = vcmp.ge.f32.partialorder %v268, 0.0
  %v285 = vmul.f32 %v253, 0.2
  %v286 = vmul.f32 %v254, 0.2
  %v287 = vmul.f32 %v255, 0.2
  %v288 = vmul.f32 %v256, 0.2
  %v289 = vmul.f32 %v257, 0.2
  %v290 = vmul.f32 %v258, 0.2
  %v291 = vmul.f32 %v259, 0.2
  %v292 = vmul.f32 %v260, 0.2
  %v293 = vmul.f32 %v261, 0.2
  %v294 = vmul.f32 %v262, 0.2
  %v295 = vmul.f32 %v263, 0.2
  %v296 = vmul.f32 %v264, 0.2
  %v297 = vmul.f32 %v265, 0.2
  %v298 = vmul.f32 %v266, 0.2
  %v299 = vmul.f32 %v267, 0.2
  %v300 = vmul.f32 %v268, 0.2
  %v301 = vsel %vm269, %v253, %v285
  %v302 = vsel %vm270, %v254, %v286
  %v303 = vsel %vm271, %v255, %v287
  %v304 = vsel %vm272, %v256, %v288
  %v305 = vsel %vm273, %v257, %v289
  %v306 = vsel %vm274, %v258, %v290
  %v307 = vsel %vm275, %v259, %v291
  %v308 = vsel %vm276, %v260, %v292
  %v309 = vsel %vm277, %v261, %v293
  %v310 = vsel %vm278, %v262, %v294
  %v311 = vsel %vm279, %v263, %v295
  %v312 = vsel %vm280, %v264, %v296
  %v313 = vsel %vm281, %v265, %v297
  %v314 = vsel %vm282, %v266, %v298
  %v315 = vsel %vm283, %v267, %v299
  %v316 = vsel %vm284, %v268, %v300
  %v317 = vadd.f32 %v301, %v134
  %v318 = vadd.f32 %v302, %v135
  %v319 = vadd.f32 %v303, %v136
  %v320 = vadd.f32 %v304, %v137
  %v321 = vadd.f32 %v305, %v138
  %v322 = vadd.f32 %v306, %v139
  %v323 = vadd.f32 %v307, %v140
  %v324 = vadd.f32 %v308, %v141
  %v325 = vadd.f32 %v309, %v142
  %v326 = vadd.f32 %v310, %v143
  %v327 = vadd.f32 %v311, %v144
  %v328 = vadd.f32 %v312, %v145
  %v329 = vadd.f32 %v313, %v146
  %v330 = vadd.f32 %v314, %v147
  %v331 = vadd.f32 %v315, %v148
  %v332 = vadd.f32 %v316, %v149
  %333 = vmax.xlane.f32.xlu0 %v317
  %v334 = vpop.xlane.xlu0 %333
  %335 = vmax.xlane.f32.xlu0 %v318
  %v336 = vpop.xlane.xlu0 %335
  %337 = vmax.xlane.f32.xlu0 %v319
  %v338 = vpop.xlane.xlu0 %337
  %339 = vmax.xlane.f32.xlu0 %v320
  %v340 = vpop.xlane.xlu0 %339
  %341 = vmax.xlane.f32.xlu0 %v321
  %v342 = vpop.xlane.xlu0 %341
  %343 = vmax.xlane.f32.xlu0 %v322
  %v344 = vpop.xlane.xlu0 %343
  %345 = vmax.xlane.f32.xlu0 %v323
  %v346 = vpop.xlane.xlu0 %345
  %347 = vmax.xlane.f32.xlu0 %v324
  %v348 = vpop.xlane.xlu0 %347
  %349 = vmax.xlane.f32.xlu0 %v325
  %v350 = vpop.xlane.xlu0 %349
  %351 = vmax.xlane.f32.xlu0 %v326
  %v352 = vpop.xlane.xlu0 %351
  %353 = vmax.xlane.f32.xlu0 %v327
  %v354 = vpop.xlane.xlu0 %353
  %355 = vmax.xlane.f32.xlu0 %v328
  %v356 = vpop.xlane.xlu0 %355
  %357 = vmax.xlane.f32.xlu0 %v329
  %v358 = vpop.xlane.xlu0 %357
  %359 = vmax.xlane.f32.xlu0 %v330
  %v360 = vpop.xlane.xlu0 %359
  %361 = vmax.xlane.f32.xlu0 %v331
  %v362 = vpop.xlane.xlu0 %361
  %363 = vmax.xlane.f32.xlu0 %v332
  %v364 = vpop.xlane.xlu0 %363
  %v365 = vsub.f32 %v317, %v334
  %v366 = vsub.f32 %v318, %v336
  %v367 = vsub.f32 %v319, %v338
  %v368 = vsub.f32 %v320, %v340
  %v369 = vsub.f32 %v321, %v342
  %v370 = vsub.f32 %v322, %v344
  %v371 = vsub.f32 %v323, %v346
  %v372 = vsub.f32 %v324, %v348
  %v373 = vsub.f32 %v325, %v350
  %v374 = vsub.f32 %v326, %v352
  %v375 = vsub.f32 %v327, %v354
  %v376 = vsub.f32 %v328, %v356
  %v377 = vsub.f32 %v329, %v358
  %v378 = vsub.f32 %v330, %v360
  %v379 = vsub.f32 %v331, %v362
  %v380 = vsub.f32 %v332, %v364
  %v381 = vmul.f32 %v365, 1.442695
  %v382 = vpow.pop %v381
  %v383 = vmul.f32 %v366, 1.442695
  %v384 = vpow.pop %v383
  %v385 = vmul.f32 %v367, 1.442695
  %v386 = vpow.pop %v385
  %v387 = vmul.f32 %v368, 1.442695
  %v388 = vpow.pop %v387
  %v389 = vmul.f32 %v369, 1.442695
  %v390 = vpow.pop %v389
  %v391 = vmul.f32 %v370, 1.442695
  %v392 = vpow.pop %v391
  %v393 = vmul.f32 %v371, 1.442695
  %v394 = vpow.pop %v393
  %v395 = vmul.f32 %v372, 1.442695
  %v396 = vpow.pop %v395
  %v397 = vmul.f32 %v373, 1.442695
  %v398 = vpow.pop %v397
  %v399 = vmul.f32 %v374, 1.442695
  %v400 = vpow.pop %v399
  %v401 = vmul.f32 %v375, 1.442695
  %v402 = vpow.pop %v401
  %v403 = vmul.f32 %v376, 1.442695
  %v404 = vpow.pop %v403
  %v405 = vmul.f32 %v377, 1.442695
  %v406 = vpow.pop %v405
  %v407 = vmul.f32 %v378, 1.442695
  %v408 = vpow.pop %v407
  %v409 = vmul.f32 %v379, 1.442695
  %v410 = vpow.pop %v409
  %v411 = vmul.f32 %v380, 1.442695
  %v412 = vpow.pop %v411
  %413 = vadd.xlane.f32.xlu0 %v382
  %v414 = vpop.xlane.xlu0 %413
  %415 = vadd.xlane.f32.xlu0 %v384
  %v416 = vpop.xlane.xlu0 %415
  %417 = vadd.xlane.f32.xlu0 %v386
  %v418 = vpop.xlane.xlu0 %417
  %419 = vadd.xlane.f32.xlu0 %v388
  %v420 = vpop.xlane.xlu0 %419
  %421 = vadd.xlane.f32.xlu0 %v390
  %v422 = vpop.xlane.xlu0 %421
  %423 = vadd.xlane.f32.xlu0 %v392
  %v424 = vpop.xlane.xlu0 %423
  %425 = vadd.xlane.f32.xlu0 %v394
  %v426 = vpop.xlane.xlu0 %425
  %427 = vadd.xlane.f32.xlu0 %v396
  %v428 = vpop.xlane.xlu0 %427
  %429 = vadd.xlane.f32.xlu0 %v398
  %v430 = vpop.xlane.xlu0 %429
  %431 = vadd.xlane.f32.xlu0 %v400
  %v432 = vpop.xlane.xlu0 %431
  %433 = vadd.xlane.f32.xlu0 %v402
  %v434 = vpop.xlane.xlu0 %433
  %435 = vadd.xlane.f32.xlu0 %v404
  %v436 = vpop.xlane.xlu0 %435
  %437 = vadd.xlane.f32.xlu0 %v406
  %v438 = vpop.xlane.xlu0 %437
  %439 = vadd.xlane.f32.xlu0 %v408
  %v440 = vpop.xlane.xlu0 %439
  %441 = vadd.xlane.f32.xlu0 %v410
  %v442 = vpop.xlane.xlu0 %441
  %443 = vadd.xlane.f32.xlu0 %v412
  %v444 = vpop.xlane.xlu0 %443
  %v445 = vpack.c.bf16 %v384, %v382
  %v446 = vpack.c.bf16 %v388, %v386
  %v447 = vpack.c.bf16 %v392, %v390
  %v448 = vpack.c.bf16 %v396, %v394
  %v449 = vpack.c.bf16 %v400, %v398
  %v450 = vpack.c.bf16 %v404, %v402
  %v451 = vpack.c.bf16 %v408, %v406
  %v452 = vpack.c.bf16 %v412, %v410
  %v453 = vld [vmem:[%s0] sm:$0xf]
  %v454 = vld [vmem:[%s0 + $0x4] sm:$0xf]
  %v455 = vld [vmem:[%s0 + $0x8] sm:$0xf]
  %v456 = vld [vmem:[%s0 + $0xc] sm:$0xf]
  %v457 = vld [vmem:[%s0 + $0x10] sm:$0xf]
  %v458 = vld [vmem:[%s0 + $0x14] sm:$0xf]
  %v459 = vld [vmem:[%s0 + $0x18] sm:$0xf]
  %v460 = vld [vmem:[%s0 + $0x1c] sm:$0xf]
  %v461 = vld [vmem:[%s0 + $0x20] sm:$0xf]
  %v462 = vld [vmem:[%s0 + $0x24] sm:$0xf]
  %v463 = vld [vmem:[%s0 + $0x28] sm:$0xf]
  %v464 = vld [vmem:[%s0 + $0x2c] sm:$0xf]
  %v465 = vld [vmem:[%s0 + $0x30] sm:$0xf]
  %v466 = vld [vmem:[%s0 + $0x34] sm:$0xf]
  %v467 = vld [vmem:[%s0 + $0x38] sm:$0xf]
  %v468 = vld [vmem:[%s0 + $0x3c] sm:$0xf]
  %v485 = vunpack.c.l.b16 %v453
  %v486 = vunpack.c.l.b16 %v454
  %v487 = vunpack.c.l.b16 %v455
  %v488 = vunpack.c.l.b16 %v456
  %v489 = vunpack.c.l.b16 %v457
  %v490 = vunpack.c.l.b16 %v458
  %v491 = vunpack.c.l.b16 %v459
  %v492 = vunpack.c.l.b16 %v460
  %v493 = vunpack.c.l.b16 %v461
  %v494 = vunpack.c.l.b16 %v462
  %v495 = vunpack.c.l.b16 %v463
  %v496 = vunpack.c.l.b16 %v464
  %v497 = vunpack.c.l.b16 %v465
  %v498 = vunpack.c.l.b16 %v466
  %v499 = vunpack.c.l.b16 %v467
  %v500 = vunpack.c.l.b16 %v468
  %v501 = vpack.c.b16 %v486, %v485
  %v502 = vpack.c.b16 %v488, %v487
  %v503 = vpack.c.b16 %v490, %v489
  %v504 = vpack.c.b16 %v492, %v491
  %v505 = vpack.c.b16 %v494, %v493
  %v506 = vpack.c.b16 %v496, %v495
  %v507 = vpack.c.b16 %v498, %v497
  %v508 = vpack.c.b16 %v500, %v499
  %517 = vmatprep.subr.bf16.mxu0 0
  %518 = vmatpush1.bf16.msra.mxu0 %v508
  %519 = vmatprep.subr.bf16.mxu0 0
  %520 = vmatpush1.bf16.msra.mxu0 %v507
  %521 = vmatprep.subr.bf16.mxu0 0
  %522 = vmatpush1.bf16.msra.mxu0 %v506
  %523 = vmatprep.subr.bf16.mxu0 0
  %524 = vmatpush1.bf16.msra.mxu0 %v505
  %525 = vmatprep.subr.bf16.mxu0 0
  %526 = vmatpush1.bf16.msra.mxu0 %v504
  %527 = vmatprep.subr.bf16.mxu0 0
  %528 = vmatpush1.bf16.msra.mxu0 %v503
  %529 = vmatprep.subr.bf16.mxu0 0
  %530 = vmatpush1.bf16.msra.mxu0 %v502
  %531 = vmatprep.subr.bf16.mxu0 0
  %532 = vmatpush1.bf16.msra.mxu0 %v501
  %533 = vmatprep.subr.bf16.mxu0 0
  %534 = vmatpush2.bf16.msra.mxu0 0
  %535 = vmatprep.subr.bf16.mxu0 0
  %536 = vmatpush2.bf16.msra.mxu0 0
  %537 = vmatprep.subr.bf16.mxu0 0
  %538 = vmatpush2.bf16.msra.mxu0 0
  %539 = vmatprep.subr.bf16.mxu0 0
  %540 = vmatpush2.bf16.msra.mxu0 0
  %541 = vmatprep.subr.bf16.mxu0 0
  %542 = vmatpush2.bf16.msra.mxu0 0
  %543 = vmatprep.subr.bf16.mxu0 0
  %544 = vmatpush2.bf16.msra.mxu0 0
  %545 = vmatprep.subr.bf16.mxu0 0
  %546 = vmatpush2.bf16.msra.mxu0 0
  %547 = vmatprep.subr.bf16.mxu0 0
  %548 = vmatpush2.bf16.msra.mxu0 0
  %549 = vmatprep.mubr.bf16.mxu0 0
  %550 = vmatmul.mubr.bf16.gmra.mxu0 %v445
  %v551 = vpop.f32.mrf.mxu0
  %v552 = vadd.f32 0.0, %v551
  %v553 = vpop.f32.mrf.mxu0
  %v554 = vpop.f32.mrf.mxu0
  %v555 = vadd.f32 0.0, %v554
  %v556 = vpop.f32.mrf.mxu0
  %557 = vmatprep.mubr.bf16.mxu0 0
  %558 = vmatmul.mubr.bf16.gmra.mxu0 %v446
  %v559 = vpop.f32.mrf.mxu0
  %v560 = vadd.f32 0.0, %v559
  %v561 = vpop.f32.mrf.mxu0
  %v562 = vpop.f32.mrf.mxu0
  %v563 = vadd.f32 0.0, %v562
  %v564 = vpop.f32.mrf.mxu0
  %565 = vmatprep.mubr.bf16.mxu0 0
  %566 = vmatmul.mubr.bf16.gmra.mxu0 %v447
  %v567 = vpop.f32.mrf.mxu0
  %v568 = vadd.f32 0.0, %v567
  %v569 = vpop.f32.mrf.mxu0
  %v570 = vpop.f32.mrf.mxu0
  %v571 = vadd.f32 0.0, %v570
  %v572 = vpop.f32.mrf.mxu0
  %573 = vmatprep.mubr.bf16.mxu0 0
  %574 = vmatmul.mubr.bf16.gmra.mxu0 %v448
  %v575 = vpop.f32.mrf.mxu0
  %v576 = vadd.f32 0.0, %v575
  %v577 = vpop.f32.mrf.mxu0
  %v578 = vpop.f32.mrf.mxu0
  %v579 = vadd.f32 0.0, %v578
  %v580 = vpop.f32.mrf.mxu0
  %581 = vmatprep.mubr.bf16.mxu0 0
  %582 = vmatmul.mubr.bf16.gmra.mxu0 %v449
  %v583 = vpop.f32.mrf.mxu0
  %v584 = vadd.f32 0.0, %v583
  %v585 = vpop.f32.mrf.mxu0
  %v586 = vpop.f32.mrf.mxu0
  %v587 = vadd.f32 0.0, %v586
  %v588 = vpop.f32.mrf.mxu0
  %589 = vmatprep.mubr.bf16.mxu0 0
  %590 = vmatmul.mubr.bf16.gmra.mxu0 %v450
  %v591 = vpop.f32.mrf.mxu0
  %v592 = vadd.f32 0.0, %v591
  %v593 = vpop.f32.mrf.mxu0
  %v594 = vpop.f32.mrf.mxu0
  %v595 = vadd.f32 0.0, %v594
  %v596 = vpop.f32.mrf.mxu0
  %597 = vmatprep.mubr.bf16.mxu0 0
  %598 = vmatmul.mubr.bf16.gmra.mxu0 %v451
  %v599 = vpop.f32.mrf.mxu0
  %v600 = vadd.f32 0.0, %v599
  %v601 = vpop.f32.mrf.mxu0
  %v602 = vpop.f32.mrf.mxu0
  %v603 = vadd.f32 0.0, %v602
  %v604 = vpop.f32.mrf.mxu0
  %605 = vmatprep.mubr.bf16.mxu0 0
  %606 = vmatmul.mubr.bf16.gmra.mxu0 %v452
  %v607 = vpop.f32.mrf.mxu0
  %v608 = vadd.f32 0.0, %v607
  %v609 = vpop.f32.mrf.mxu0
  %v610 = vpop.f32.mrf.mxu0
  %v611 = vadd.f32 0.0, %v610
  %v612 = vpop.f32.mrf.mxu0
  %613 = vdwg.mxu0
  %v614 = vrcp.pop %v414
  %v615 = vrcp.pop %v416
  %v616 = vrcp.pop %v418
  %v617 = vrcp.pop %v420
  %v618 = vrcp.pop %v422
  %v619 = vrcp.pop %v424
  %v620 = vrcp.pop %v426
  %v621 = vrcp.pop %v428
  %v622 = vrcp.pop %v430
  %v623 = vrcp.pop %v432
  %v624 = vrcp.pop %v434
  %v625 = vrcp.pop %v436
  %v626 = vrcp.pop %v438
  %v627 = vrcp.pop %v440
  %v628 = vrcp.pop %v442
  %v629 = vrcp.pop %v444
  %v630 = vmul.f32 %v552, %v614
  %v631 = vmul.f32 %v555, %v615
  %v632 = vmul.f32 %v560, %v616
  %v633 = vmul.f32 %v563, %v617
  %v634 = vmul.f32 %v568, %v618
  %v635 = vmul.f32 %v571, %v619
  %v636 = vmul.f32 %v576, %v620
  %v637 = vmul.f32 %v579, %v621
  %v638 = vmul.f32 %v584, %v622
  %v639 = vmul.f32 %v587, %v623
  %v640 = vmul.f32 %v592, %v624
  %v641 = vmul.f32 %v595, %v625
  %v642 = vmul.f32 %v600, %v626
  %v643 = vmul.f32 %v603, %v627
  %v644 = vmul.f32 %v608, %v628
  %v645 = vmul.f32 %v611, %v629
  %v646 = vld [vmem:[%s3] sm:$0x1]
  %v648 = vlaneseq
  %v649 = vshrl.u32 %v648, 7
  %v650 = vsub.s32 0, %v649
  %v651 = vrot.slane %v646, %v650
  %v653 = vadd.f32 %v630, %v651
  %v654 = vadd.f32 %v631, %v651
  %v655 = vadd.f32 %v632, %v651
  %v656 = vadd.f32 %v633, %v651
  %v657 = vadd.f32 %v634, %v651
  %v658 = vadd.f32 %v635, %v651
  %v659 = vadd.f32 %v636, %v651
  %v660 = vadd.f32 %v637, %v651
  %v661 = vadd.f32 %v638, %v651
  %v662 = vadd.f32 %v639, %v651
  %v663 = vadd.f32 %v640, %v651
  %v664 = vadd.f32 %v641, %v651
  %v665 = vadd.f32 %v642, %v651
  %v666 = vadd.f32 %v643, %v651
  %v667 = vadd.f32 %v644, %v651
  %v668 = vadd.f32 %v645, %v651
  %v669 = vmax.f32 %v653, 0.0
  %v670 = vmax.f32 %v654, 0.0
  %v671 = vmax.f32 %v655, 0.0
  %v672 = vmax.f32 %v656, 0.0
  %v673 = vmax.f32 %v657, 0.0
  %v674 = vmax.f32 %v658, 0.0
  %v675 = vmax.f32 %v659, 0.0
  %v676 = vmax.f32 %v660, 0.0
  %v677 = vmax.f32 %v661, 0.0
  %v678 = vmax.f32 %v662, 0.0
  %v679 = vmax.f32 %v663, 0.0
  %v680 = vmax.f32 %v664, 0.0
  %v681 = vmax.f32 %v665, 0.0
  %v682 = vmax.f32 %v666, 0.0
  %v683 = vmax.f32 %v667, 0.0
  %v684 = vmax.f32 %v668, 0.0
  %v685 = vpack.c.bf16 %v670, %v669
  %v686 = vpack.c.bf16 %v672, %v671
  %v687 = vpack.c.bf16 %v674, %v673
  %v688 = vpack.c.bf16 %v676, %v675
  %v689 = vpack.c.bf16 %v678, %v677
  %v690 = vpack.c.bf16 %v680, %v679
  %v691 = vpack.c.bf16 %v682, %v681
  %v692 = vpack.c.bf16 %v684, %v683
  %v701 = vunpack.c.l.b16 %v685
  %v702 = vunpack.c.h.b16 %v685
  %v703 = vunpack.c.l.b16 %v686
  %v704 = vunpack.c.h.b16 %v686
  %v705 = vunpack.c.l.b16 %v687
  %v706 = vunpack.c.h.b16 %v687
  %v707 = vunpack.c.l.b16 %v688
  %v708 = vunpack.c.h.b16 %v688
  %v709 = vunpack.c.l.b16 %v689
  %v710 = vunpack.c.h.b16 %v689
  %v711 = vunpack.c.l.b16 %v690
  %v712 = vunpack.c.h.b16 %v690
  %v713 = vunpack.c.l.b16 %v691
  %v714 = vunpack.c.h.b16 %v691
  %v715 = vunpack.c.l.b16 %v692
  %v716 = vunpack.c.h.b16 %v692
  %v717 = vpack.c.b16 %v701, %v701
  %v718 = vpack.c.b16 %v702, %v702
  %v719 = vpack.c.b16 %v703, %v703
  %v720 = vpack.c.b16 %v704, %v704
  %v721 = vpack.c.b16 %v705, %v705
  %v722 = vpack.c.b16 %v706, %v706
  %v723 = vpack.c.b16 %v707, %v707
  %v724 = vpack.c.b16 %v708, %v708
  %v725 = vpack.c.b16 %v709, %v709
  %v726 = vpack.c.b16 %v710, %v710
  %v727 = vpack.c.b16 %v711, %v711
  %v728 = vpack.c.b16 %v712, %v712
  %v729 = vpack.c.b16 %v713, %v713
  %v730 = vpack.c.b16 %v714, %v714
  %v731 = vpack.c.b16 %v715, %v715
  %v732 = vpack.c.b16 %v716, %v716
  %749 = vst [vmem:[%s5] sm:$0xf] %v717
  %750 = vst [vmem:[%s5 + $0x4] sm:$0xf] %v718
  %751 = vst [vmem:[%s5 + $0x8] sm:$0xf] %v719
  %752 = vst [vmem:[%s5 + $0xc] sm:$0xf] %v720
  %753 = vst [vmem:[%s5 + $0x10] sm:$0xf] %v721
  %754 = vst [vmem:[%s5 + $0x14] sm:$0xf] %v722
  %755 = vst [vmem:[%s5 + $0x18] sm:$0xf] %v723
  %756 = vst [vmem:[%s5 + $0x1c] sm:$0xf] %v724
  %757 = vst [vmem:[%s5 + $0x20] sm:$0xf] %v725
  %758 = vst [vmem:[%s5 + $0x24] sm:$0xf] %v726
  %759 = vst [vmem:[%s5 + $0x28] sm:$0xf] %v727
  %760 = vst [vmem:[%s5 + $0x2c] sm:$0xf] %v728
  %761 = vst [vmem:[%s5 + $0x30] sm:$0xf] %v729
  %762 = vst [vmem:[%s5 + $0x34] sm:$0xf] %v730
  %763 = vst [vmem:[%s5 + $0x38] sm:$0xf] %v731
  %764 = vst [vmem:[%s5 + $0x3c] sm:$0xf] %v732
  // Predicated region
  $region22: #{gat_forward.2} parent=0 // pred_check
    _
  $region23: #{gat_forward.2} parent=0 // pred_check_branch
    %766 = sbr.rel (0) target = $region25
  $region24: #{gat_forward.2} parent=0 // pred_region
    _
  $region25: #{gat_forward.2} parent=0 // pred_fallthru
    _
  // Predicated region
  $region26: #{gat_forward.2} parent=0 // pred_check
    _
  $region27: #{gat_forward.2} parent=0 // pred_check_branch
    %768 = sbr.rel (0) target = $region29
  $region28: #{gat_forward.2} parent=0 // pred_region
    _
  $region29: #{gat_forward.2} parent=0 // pred_fallthru
    _

</llo_original>
